<compile_context>
chip_gen: v6e
topology: v6e:2x2x1
jax: 0.10.0
libtpu: 0.0.40
codegen_flags: <defaults>
</compile_context>

<pallas_src>
import functools

import jax
import jax.numpy as jnp
import numpy as np
from jax.experimental import pallas as pl
from jax.experimental.pallas import tpu as pltpu


# -----------------------------------------------------------------------------
# Chip introspection: (#TensorCores per Pallas device, prefer bf16 matmuls)
# -----------------------------------------------------------------------------
def _tpu_layout_info():
    try:
        kind = jax.devices()[0].device_kind.lower()
    except Exception:
        return 1, False
    lite = ("lite" in kind) or ("v5e" in kind) or ("v6e" in kind)
    if "v7" in kind:                       # 2 TCs / chip, bf16-native MXU+VPU
        return 2, True
    if "v6" in kind:                       # single TC, bf16-native MXU+VPU
        return 1, True
    if ("v4" in kind) or ("v5" in kind and not lite):   # megacore v4 / v5p
        return 2, False
    return 1, False                        # v5e / v2 / v3 / unknown -> safe path


# -----------------------------------------------------------------------------
# Pallas kernel
# -----------------------------------------------------------------------------
def _make_lstm_kernel(num_layers: int, seq_len: int, batch_pad: int,
                      hidden: int, mm_dtype):
    """Builds the kernel body (closure over static sizes / layer count)."""
    T, B, H = seq_len, batch_pad, hidden

    def kernel(*refs):
        # ref ordering:
        #   x_ref,
        #   (w_ih_T, w_hh_T, bias) * num_layers,     gate cols already [i,f,o,g]
        #   fc_w_T(padded), fc_b(padded),
        #   out_ref,
        #   seq_ref   (scratch: (T*B, H) f32 layer-output sequence)
        #   gx_ref    (scratch: (T*B, 4H) f32 hoisted input projection)
        x_ref = refs[0]
        idx = 1
        layer_refs = []
        for _ in range(num_layers):
            layer_refs.append((refs[idx], refs[idx + 1], refs[idx + 2]))
            idx += 3
        fc_w_ref = refs[idx]
        fc_b_ref = refs[idx + 1]
        out_ref = refs[idx + 2]
        seq_ref = refs[idx + 3]
        gx_ref = refs[idx + 4]

        h = jnp.zeros((B, H), jnp.float32)
        for layer in range(num_layers):
            w_ih_ref, w_hh_ref, b_ref = layer_refs[layer]
            last = (layer == num_layers - 1)

            # layer 0 reads the (time-major, batch-padded, flattened) input;
            # deeper layers read the previous layer's output-sequence scratch.
            if layer == 0:
                in_seq = x_ref[...]                              # (T*B, F_in) mm_dtype
            else:
                in_seq = seq_ref[...].astype(mm_dtype)           # (T*B, H)

            # Hoisted input projection + combined bias: ONE matmul per layer,
            # written to an explicit VMEM scratch (aligned per-step loads).
            gx_ref[...] = (jnp.dot(in_seq, w_ih_ref[...],
                                   preferred_element_type=jnp.float32)
                           + b_ref[...])                         # (T*B, 4H) f32

            w_hh = w_hh_ref[...]                                 # (H, 4H) mm_dtype

            # reset_h_c_states(): zero hidden & cell state per layer
            h = jnp.zeros((B, H), jnp.float32)
            c = jnp.zeros((B, H), jnp.float32)

            # Fully unrolled recurrence (T static & small); h/c live in vregs.
            # TODO(synk): switch to lax.fori_loop(unroll=2-4) for large T.
            for t in range(T):
                gates = gx_ref[pl.ds(t * B, B), :] + jnp.dot(
                    h.astype(mm_dtype), w_hh,
                    preferred_element_type=jnp.float32)          # (B, 4H) f32
                # gate columns are pre-permuted to [i, f, o, g]:
                # sigmoid over one contiguous 3H slab, tanh over the H "g" slab.
                sig = jax.nn.sigmoid(gates[:, :3 * H])
                g_g = jnp.tanh(gates[:, 3 * H:])
                i_g = sig[:, 0 * H:1 * H]
                f_g = sig[:, 1 * H:2 * H]
                o_g = sig[:, 2 * H:3 * H]
                c = f_g * c + i_g * g_g
                h = o_g * jnp.tanh(c)
                if not last:
                    # aligned (B multiple of 8) f32 store; last layer skips it
                    seq_ref[pl.ds(t * B, B), :] = h

        # fc(lstm_out[:, -1, :]) : last hidden state @ W_fc^T + b_fc
        # (lane-padded output -> unmasked store; wrapper slices padding off)
        out_ref[...] = (jnp.dot(h.astype(mm_dtype), fc_w_ref[...],
                                preferred_element_type=jnp.float32)
                        + fc_b_ref[...])

    return kernel


# -----------------------------------------------------------------------------
# Wrapper
# -----------------------------------------------------------------------------
def centroid_prediction_lstm(x, params, *, hidden_features, num_layers,
                             seq_len_out, output_features):
    """x: (batch, seq_len_in, input_features) -> (batch, seq_len_out, output_features)."""
    B, T, F_in = x.shape
    H = hidden_features
    n_out = seq_len_out * output_features
    n_pad = ((n_out + 127) // 128) * 128

    num_tc, prefer_bf16 = _tpu_layout_info()
    mm_dtype = jnp.bfloat16 if prefer_bf16 else jnp.float32

    # Split the batch across grid blocks only where there are 2 TensorCores;
    # on a single-TC chip grid=(2,) just runs the serial recurrence twice.
    num_blocks = 2 if (num_tc >= 2 and B % 2 == 0 and B >= 16) else 1
    B_blk = B // num_blocks
    B_pad = ((B_blk + 7) // 8) * 8          # sublane-align per-step slices/stores

    # time-major, batch-blocked, sublane-padded, flattened: row = t * B_pad + b
    x_tm = jnp.transpose(x.astype(jnp.float32), (1, 0, 2))            # (T, B, F)
    x_blk = x_tm.reshape(T, num_blocks, B_blk, F_in).transpose(1, 0, 2, 3)
    x_blk = jnp.pad(x_blk, ((0, 0), (0, 0), (0, B_pad - B_blk), (0, 0)))
    x_blk = x_blk.reshape(num_blocks, T * B_pad, F_in).astype(mm_dtype)

    # permute gate columns from PyTorch [i, f, g, o] to kernel order [i, f, o, g]
    def permute_gates(a):
        return jnp.concatenate([a[..., 0:H], a[..., H:2 * H],
                                a[..., 3 * H:4 * H], a[..., 2 * H:3 * H]], axis=-1)

    kernel_inputs = [x_blk]
    in_specs = [pl.BlockSpec((None, T * B_pad, F_in), lambda i: (i, 0, 0))]
    for (w_ih_t, w_hh_t, b) in params["layers"]:
        w_ih_t = permute_gates(w_ih_t.astype(jnp.float32)).astype(mm_dtype)
        w_hh_t = permute_gates(w_hh_t.astype(jnp.float32)).astype(mm_dtype)
        b = permute_gates(b.astype(jnp.float32))
        kernel_inputs += [w_ih_t, w_hh_t, b]
        in_specs += [
            pl.BlockSpec(w_ih_t.shape, lambda i: (0, 0)),
            pl.BlockSpec(w_hh_t.shape, lambda i: (0, 0)),
            pl.BlockSpec(b.shape, lambda i: (0, 0)),
        ]

    # lane-pad the fc weights/bias so the final store is lane-dense (unmasked vst)
    fc_w_p = jnp.pad(params["fc_w_t"].astype(jnp.float32),
                     ((0, 0), (0, n_pad - n_out))).astype(mm_dtype)    # (H, n_pad)
    fc_b_p = jnp.pad(params["fc_b"].astype(jnp.float32),
                     ((0, 0), (0, n_pad - n_out)))                     # (1, n_pad)
    kernel_inputs += [fc_w_p, fc_b_p]
    in_specs += [pl.BlockSpec(fc_w_p.shape, lambda i: (0, 0)),
                 pl.BlockSpec(fc_b_p.shape, lambda i: (0, 0))]

    # VMEM budget (explicit) and advisory cost estimate
    in_bytes = sum(int(np.prod(a.shape)) * a.dtype.itemsize for a in kernel_inputs)
    scratch_bytes = T * B_pad * H * 4 + T * B_pad * 4 * H * 4
    out_bytes = num_blocks * B_pad * n_pad * 4
    vmem_limit = int(min(64 * 2 ** 20,
                         max(32 * 2 ** 20,
                             4 * in_bytes + 2 * scratch_bytes + 4 * out_bytes)))

    flops = 0
    in_l = F_in
    for _ in range(num_layers):
        flops += 2 * T * B * in_l * 4 * H + 2 * T * B * H * 4 * H
        in_l = H
    flops += 2 * B * H * n_out
    transcendentals = num_layers * T * B * 5 * H

    out_padded = pl.pallas_call(
        _make_lstm_kernel(num_layers, T, B_pad, H, mm_dtype),
        out_shape=jax.ShapeDtypeStruct((num_blocks, B_pad, n_pad), jnp.float32),
        grid=(num_blocks,),
        in_specs=in_specs,
        out_specs=pl.BlockSpec((None, B_pad, n_pad), lambda i: (i, 0, 0)),
        scratch_shapes=[
            pltpu.VMEM((T * B_pad, H), jnp.float32),       # layer output sequence
            pltpu.VMEM((T * B_pad, 4 * H), jnp.float32),   # hoisted input projection
        ],
        compiler_params=pltpu.CompilerParams(
            dimension_semantics=("parallel",),
            vmem_limit_bytes=vmem_limit),
        cost_estimate=pl.CostEstimate(
            flops=int(flops),
            transcendentals=int(transcendentals),
            bytes_accessed=int(in_bytes + out_bytes)),
    )(*kernel_inputs)

    out = out_padded[:, :B_blk, :n_out].reshape(B, n_out)
    return out.reshape(B, seq_len_out, output_features)


# -----------------------------------------------------------------------------
# Deterministic parameter construction (PyTorch-style U(-1/sqrt(H), 1/sqrt(H)))
# -----------------------------------------------------------------------------
def init_params(key, input_features, hidden_features, num_layers,
                seq_len_out, output_features):
    H = hidden_features
    k = 1.0 / np.sqrt(H)
    layers = []
    for layer in range(num_layers):
        in_l = input_features if layer == 0 else H
        key, k1, k2, k3, k4 = jax.random.split(key, 5)
        w_ih = jax.random.uniform(k1, (4 * H, in_l), jnp.float32, -k, k)
        w_hh = jax.random.uniform(k2, (4 * H, H), jnp.float32, -k, k)
        b_ih = jax.random.uniform(k3, (4 * H,), jnp.float32, -k, k)
        b_hh = jax.random.uniform(k4, (4 * H,), jnp.float32, -k, k)
        layers.append((w_ih.T,                          # (in_l, 4H), torch [i,f,g,o]
                       w_hh.T,                          # (H, 4H)
                       (b_ih + b_hh).reshape(1, 4 * H)))
    key, k1, k2 = jax.random.split(key, 3)
    kf = 1.0 / np.sqrt(H)
    fc_w = jax.random.uniform(k1, (seq_len_out * output_features, H),
                              jnp.float32, -kf, kf)
    fc_b = jax.random.uniform(k2, (seq_len_out * output_features,),
                              jnp.float32, -kf, kf)
    return {"layers": layers,
            "fc_w_t": fc_w.T,                           # (H, S_out*O)
            "fc_b": fc_b.reshape(1, -1)}


# -----------------------------------------------------------------------------
# Pure-JAX reference (mirrors torch.nn.LSTM + Linear forward, f32)
# -----------------------------------------------------------------------------
def reference_forward(x, params, *, hidden_features, num_layers,
                      seq_len_out, output_features):
    B, T, _ = x.shape
    H = hidden_features
    seq = x.astype(jnp.float32)
    for (w_ih_t, w_hh_t, b) in params["layers"]:
        h = jnp.zeros((B, H), jnp.float32)
        c = jnp.zeros((B, H), jnp.float32)
        outs = []
        for t in range(T):
            gates = seq[:, t, :] @ w_ih_t + h @ w_hh_t + b
            i_g = jax.nn.sigmoid(gates[:, 0 * H:1 * H])
            f_g = jax.nn.sigmoid(gates[:, 1 * H:2 * H])
            g_g = jnp.tanh(gates[:, 2 * H:3 * H])
            o_g = jax.nn.sigmoid(gates[:, 3 * H:4 * H])
            c = f_g * c + i_g * g_g
            h = o_g * jnp.tanh(c)
            outs.append(h)
        seq = jnp.stack(outs, axis=1)
    pred = h @ params["fc_w_t"] + params["fc_b"]
    return pred.reshape(B, seq_len_out, output_features)


# -----------------------------------------------------------------------------
if __name__ == "__main__":
    # small shapes consistent with the module's forward
    batch = 2
    seq_len_in = 8
    input_features = 4
    hidden_features = 32
    output_features = 2
    seq_len_out = 5
    num_layers = 2

    key = jax.random.PRNGKey(0)
    key, kx = jax.random.split(key)
    x = jax.random.normal(kx, (batch, seq_len_in, input_features), jnp.float32)

    params = init_params(key, input_features, hidden_features, num_layers,
                         seq_len_out, output_features)

    run = functools.partial(centroid_prediction_lstm,
                            hidden_features=hidden_features,
                            num_layers=num_layers,
                            seq_len_out=seq_len_out,
                            output_features=output_features)

    out = jax.block_until_ready(run(x, params))

    ref = reference_forward(x, params,
                            hidden_features=hidden_features,
                            num_layers=num_layers,
                            seq_len_out=seq_len_out,
                            output_features=output_features)

    assert out.shape == (batch, seq_len_out, output_features), out.shape
    # bf16 matmul path (v6e/v7x) needs looser tolerances vs the f32 reference
    _, _prefer_bf16 = _tpu_layout_info()
    tol = 2e-2 if _prefer_bf16 else 1e-5
    np.testing.assert_allclose(np.asarray(out), np.asarray(ref),
                               rtol=tol, atol=tol)
    print("KERNEL_OK")
</pallas_src>

<mosaic_0001>
module attributes {stable_mosaic.version = 11 : i64} {
  func.func @kernel(%arg0: i32, %arg1: memref<1x64x4xf32, #tpu.memory_space<vmem>>, %arg2: memref<4x128xf32, #tpu.memory_space<vmem>>, %arg3: memref<32x128xf32, #tpu.memory_space<vmem>>, %arg4: memref<1x128xf32, #tpu.memory_space<vmem>>, %arg5: memref<32x128xf32, #tpu.memory_space<vmem>>, %arg6: memref<32x128xf32, #tpu.memory_space<vmem>>, %arg7: memref<1x128xf32, #tpu.memory_space<vmem>>, %arg8: memref<32x128xf32, #tpu.memory_space<vmem>>, %arg9: memref<1x128xf32, #tpu.memory_space<vmem>>, %arg10: memref<1x8x128xf32, #tpu.memory_space<vmem>>, %arg11: memref<64x32xf32, #tpu.memory_space<vmem>>, %arg12: memref<64x128xf32, #tpu.memory_space<vmem>>) attributes {dimension_semantics = [#tpu.dimension_semantics<parallel>], iteration_bounds = array<i64: 1>, scalar_prefetch = 0 : i64, scratch_operands = 2 : i64, tpu.core_type = #tpu.core_type<tc>, window_params = [{transform_indices = @transform_0, window_bounds = array<i64: 1, 64, 4>}, {pipeline_mode = #tpu.pipeline_mode<synchronous>, transform_indices = @transform_1, window_bounds = array<i64: 4, 128>}, {pipeline_mode = #tpu.pipeline_mode<synchronous>, transform_indices = @transform_2, window_bounds = array<i64: 32, 128>}, {pipeline_mode = #tpu.pipeline_mode<synchronous>, transform_indices = @transform_3, window_bounds = array<i64: 1, 128>}, {pipeline_mode = #tpu.pipeline_mode<synchronous>, transform_indices = @transform_4, window_bounds = array<i64: 32, 128>}, {pipeline_mode = #tpu.pipeline_mode<synchronous>, transform_indices = @transform_5, window_bounds = array<i64: 32, 128>}, {pipeline_mode = #tpu.pipeline_mode<synchronous>, transform_indices = @transform_6, window_bounds = array<i64: 1, 128>}, {pipeline_mode = #tpu.pipeline_mode<synchronous>, transform_indices = @transform_7, window_bounds = array<i64: 32, 128>}, {pipeline_mode = #tpu.pipeline_mode<synchronous>, transform_indices = @transform_8, window_bounds = array<i64: 1, 128>}, {transform_indices = @transform_9, window_bounds = array<i64: 1, 8, 128>}]} {
    %c0 = arith.constant 0 : index
    %c0_0 = arith.constant 0 : index
    %c0_1 = arith.constant 0 : index
    %0 = vector.load %arg1[%c0, %c0_0, %c0_1] : memref<1x64x4xf32, #tpu.memory_space<vmem>>, vector<1x64x4xf32>
    %1 = vector.shape_cast %0 : vector<1x64x4xf32> to vector<64x4xf32>
    %c0_2 = arith.constant 0 : index
    %c0_3 = arith.constant 0 : index
    %2 = vector.load %arg2[%c0_2, %c0_3] : memref<4x128xf32, #tpu.memory_space<vmem>>, vector<4x128xf32>
    %cst = arith.constant dense<0.000000e+00> : vector<64x128xf32>
    %3 = tpu.matmul %1, %2, %cst {dimension_numbers = #tpu.dot_dimension_numbers<[1], [0], [0], [1], [0, 0, 1, 1], [], []>} : vector<64x4xf32>, vector<4x128xf32>, vector<64x128xf32> -> vector<64x128xf32>
    %c0_4 = arith.constant 0 : index
    %c0_5 = arith.constant 0 : index
    %4 = vector.load %arg4[%c0_4, %c0_5] : memref<1x128xf32, #tpu.memory_space<vmem>>, vector<1x128xf32>
    %5 = vector.broadcast %4 : vector<1x128xf32> to vector<64x128xf32>
    %6 = arith.addf %3, %5 : vector<64x128xf32>
    %c0_6 = arith.constant 0 : index
    %c0_7 = arith.constant 0 : index
    %7 = vector.load %arg12[%c0_6, %c0_7] : memref<64x128xf32, #tpu.memory_space<vmem>>, vector<64x128xf32>
    tpu.vector_store %arg12[%c0_6, %c0_7], %6 {strides = array<i32>} : memref<64x128xf32, #tpu.memory_space<vmem>>, vector<64x128xf32>,
    %c0_8 = arith.constant 0 : index
    %c0_9 = arith.constant 0 : index
    %8 = vector.load %arg3[%c0_8, %c0_9] : memref<32x128xf32, #tpu.memory_space<vmem>>, vector<32x128xf32>
    %cst_10 = arith.constant 0.000000e+00 : f32
    %9 = vector.broadcast %cst_10 : f32 to vector<8x32xf32>
    %cst_11 = arith.constant 0.000000e+00 : f32
    %10 = vector.broadcast %cst_11 : f32 to vector<8x32xf32>
    %c0_12 = arith.constant 0 : index
    %c0_13 = arith.constant 0 : index
    %11 = vector.load %arg12[%c0_12, %c0_13] : memref<64x128xf32, #tpu.memory_space<vmem>>, vector<8x128xf32>
    %cst_14 = arith.constant dense<0.000000e+00> : vector<8x128xf32>
    %12 = tpu.matmul %9, %8, %cst_14 {dimension_numbers = #tpu.dot_dimension_numbers<[1], [0], [0], [1], [0, 0, 1, 1], [], []>} : vector<8x32xf32>, vector<32x128xf32>, vector<8x128xf32> -> vector<8x128xf32>
    %13 = arith.addf %11, %12 : vector<8x128xf32>
    %14 = vector.extract_strided_slice %13 {offsets = [0, 0], sizes = [8, 96], strides = [1, 1]} : vector<8x128xf32> to vector<8x96xf32>
    %15 = arith.negf %14 : vector<8x96xf32>
    %16 = math.exp %15 : vector<8x96xf32>
    %cst_15 = arith.constant 1.000000e+00 : f32
    %17 = vector.broadcast %cst_15 : f32 to vector<8x96xf32>
    %18 = arith.addf %17, %16 : vector<8x96xf32>
    %19 = arith.divf %17, %18 : vector<8x96xf32>
    %20 = vector.extract_strided_slice %13 {offsets = [0, 96], sizes = [8, 32], strides = [1, 1]} : vector<8x128xf32> to vector<8x32xf32>
    %21 = math.tanh %20 : vector<8x32xf32>
    %22 = vector.extract_strided_slice %19 {offsets = [0, 0], sizes = [8, 32], strides = [1, 1]} : vector<8x96xf32> to vector<8x32xf32>
    %23 = vector.extract_strided_slice %19 {offsets = [0, 32], sizes = [8, 32], strides = [1, 1]} : vector<8x96xf32> to vector<8x32xf32>
    %24 = vector.extract_strided_slice %19 {offsets = [0, 64], sizes = [8, 32], strides = [1, 1]} : vector<8x96xf32> to vector<8x32xf32>
    %25 = arith.mulf %23, %10 : vector<8x32xf32>
    %26 = arith.mulf %22, %21 : vector<8x32xf32>
    %27 = arith.addf %25, %26 : vector<8x32xf32>
    %28 = math.tanh %27 : vector<8x32xf32>
    %29 = arith.mulf %24, %28 : vector<8x32xf32>
    %c0_16 = arith.constant 0 : index
    %c0_17 = arith.constant 0 : index
    %30 = vector.load %arg11[%c0_16, %c0_17] : memref<64x32xf32, #tpu.memory_space<vmem>>, vector<8x32xf32>
    tpu.vector_store %arg11[%c0_16, %c0_17], %29 {strides = array<i32>} : memref<64x32xf32, #tpu.memory_space<vmem>>, vector<8x32xf32>,
    %c8 = arith.constant 8 : index
    %c0_18 = arith.constant 0 : index
    %31 = vector.load %arg12[%c8, %c0_18] : memref<64x128xf32, #tpu.memory_space<vmem>>, vector<8x128xf32>
    %cst_19 = arith.constant dense<0.000000e+00> : vector<8x128xf32>
    %32 = tpu.matmul %29, %8, %cst_19 {dimension_numbers = #tpu.dot_dimension_numbers<[1], [0], [0], [1], [0, 0, 1, 1], [], []>} : vector<8x32xf32>, vector<32x128xf32>, vector<8x128xf32> -> vector<8x128xf32>
    %33 = arith.addf %31, %32 : vector<8x128xf32>
    %34 = vector.extract_strided_slice %33 {offsets = [0, 0], sizes = [8, 96], strides = [1, 1]} : vector<8x128xf32> to vector<8x96xf32>
    %35 = arith.negf %34 : vector<8x96xf32>
    %36 = math.exp %35 : vector<8x96xf32>
    %cst_20 = arith.constant 1.000000e+00 : f32
    %37 = vector.broadcast %cst_20 : f32 to vector<8x96xf32>
    %38 = arith.addf %37, %36 : vector<8x96xf32>
    %39 = arith.divf %37, %38 : vector<8x96xf32>
    %40 = vector.extract_strided_slice %33 {offsets = [0, 96], sizes = [8, 32], strides = [1, 1]} : vector<8x128xf32> to vector<8x32xf32>
    %41 = math.tanh %40 : vector<8x32xf32>
    %42 = vector.extract_strided_slice %39 {offsets = [0, 0], sizes = [8, 32], strides = [1, 1]} : vector<8x96xf32> to vector<8x32xf32>
    %43 = vector.extract_strided_slice %39 {offsets = [0, 32], sizes = [8, 32], strides = [1, 1]} : vector<8x96xf32> to vector<8x32xf32>
    %44 = vector.extract_strided_slice %39 {offsets = [0, 64], sizes = [8, 32], strides = [1, 1]} : vector<8x96xf32> to vector<8x32xf32>
    %45 = arith.mulf %43, %27 : vector<8x32xf32>
    %46 = arith.mulf %42, %41 : vector<8x32xf32>
    %47 = arith.addf %45, %46 : vector<8x32xf32>
    %48 = math.tanh %47 : vector<8x32xf32>
    %49 = arith.mulf %44, %48 : vector<8x32xf32>
    %c8_21 = arith.constant 8 : index
    %c0_22 = arith.constant 0 : index
    %50 = vector.load %arg11[%c8_21, %c0_22] : memref<64x32xf32, #tpu.memory_space<vmem>>, vector<8x32xf32>
    tpu.vector_store %arg11[%c8_21, %c0_22], %49 {strides = array<i32>} : memref<64x32xf32, #tpu.memory_space<vmem>>, vector<8x32xf32>,
    %c16 = arith.constant 16 : index
    %c0_23 = arith.constant 0 : index
    %51 = vector.load %arg12[%c16, %c0_23] : memref<64x128xf32, #tpu.memory_space<vmem>>, vector<8x128xf32>
    %cst_24 = arith.constant dense<0.000000e+00> : vector<8x128xf32>
    %52 = tpu.matmul %49, %8, %cst_24 {dimension_numbers = #tpu.dot_dimension_numbers<[1], [0], [0], [1], [0, 0, 1, 1], [], []>} : vector<8x32xf32>, vector<32x128xf32>, vector<8x128xf32> -> vector<8x128xf32>
    %53 = arith.addf %51, %52 : vector<8x128xf32>
    %54 = vector.extract_strided_slice %53 {offsets = [0, 0], sizes = [8, 96], strides = [1, 1]} : vector<8x128xf32> to vector<8x96xf32>
    %55 = arith.negf %54 : vector<8x96xf32>
    %56 = math.exp %55 : vector<8x96xf32>
    %cst_25 = arith.constant 1.000000e+00 : f32
    %57 = vector.broadcast %cst_25 : f32 to vector<8x96xf32>
    %58 = arith.addf %57, %56 : vector<8x96xf32>
    %59 = arith.divf %57, %58 : vector<8x96xf32>
    %60 = vector.extract_strided_slice %53 {offsets = [0, 96], sizes = [8, 32], strides = [1, 1]} : vector<8x128xf32> to vector<8x32xf32>
    %61 = math.tanh %60 : vector<8x32xf32>
    %62 = vector.extract_strided_slice %59 {offsets = [0, 0], sizes = [8, 32], strides = [1, 1]} : vector<8x96xf32> to vector<8x32xf32>
    %63 = vector.extract_strided_slice %59 {offsets = [0, 32], sizes = [8, 32], strides = [1, 1]} : vector<8x96xf32> to vector<8x32xf32>
    %64 = vector.extract_strided_slice %59 {offsets = [0, 64], sizes = [8, 32], strides = [1, 1]} : vector<8x96xf32> to vector<8x32xf32>
    %65 = arith.mulf %63, %47 : vector<8x32xf32>
    %66 = arith.mulf %62, %61 : vector<8x32xf32>
    %67 = arith.addf %65, %66 : vector<8x32xf32>
    %68 = math.tanh %67 : vector<8x32xf32>
    %69 = arith.mulf %64, %68 : vector<8x32xf32>
    %c16_26 = arith.constant 16 : index
    %c0_27 = arith.constant 0 : index
    %70 = vector.load %arg11[%c16_26, %c0_27] : memref<64x32xf32, #tpu.memory_space<vmem>>, vector<8x32xf32>
    tpu.vector_store %arg11[%c16_26, %c0_27], %69 {strides = array<i32>} : memref<64x32xf32, #tpu.memory_space<vmem>>, vector<8x32xf32>,
    %c24 = arith.constant 24 : index
    %c0_28 = arith.constant 0 : index
    %71 = vector.load %arg12[%c24, %c0_28] : memref<64x128xf32, #tpu.memory_space<vmem>>, vector<8x128xf32>
    %cst_29 = arith.constant dense<0.000000e+00> : vector<8x128xf32>
    %72 = tpu.matmul %69, %8, %cst_29 {dimension_numbers = #tpu.dot_dimension_numbers<[1], [0], [0], [1], [0, 0, 1, 1], [], []>} : vector<8x32xf32>, vector<32x128xf32>, vector<8x128xf32> -> vector<8x128xf32>
    %73 = arith.addf %71, %72 : vector<8x128xf32>
    %74 = vector.extract_strided_slice %73 {offsets = [0, 0], sizes = [8, 96], strides = [1, 1]} : vector<8x128xf32> to vector<8x96xf32>
    %75 = arith.negf %74 : vector<8x96xf32>
    %76 = math.exp %75 : vector<8x96xf32>
    %cst_30 = arith.constant 1.000000e+00 : f32
    %77 = vector.broadcast %cst_30 : f32 to vector<8x96xf32>
    %78 = arith.addf %77, %76 : vector<8x96xf32>
    %79 = arith.divf %77, %78 : vector<8x96xf32>
    %80 = vector.extract_strided_slice %73 {offsets = [0, 96], sizes = [8, 32], strides = [1, 1]} : vector<8x128xf32> to vector<8x32xf32>
    %81 = math.tanh %80 : vector<8x32xf32>
    %82 = vector.extract_strided_slice %79 {offsets = [0, 0], sizes = [8, 32], strides = [1, 1]} : vector<8x96xf32> to vector<8x32xf32>
    %83 = vector.extract_strided_slice %79 {offsets = [0, 32], sizes = [8, 32], strides = [1, 1]} : vector<8x96xf32> to vector<8x32xf32>
    %84 = vector.extract_strided_slice %79 {offsets = [0, 64], sizes = [8, 32], strides = [1, 1]} : vector<8x96xf32> to vector<8x32xf32>
    %85 = arith.mulf %83, %67 : vector<8x32xf32>
    %86 = arith.mulf %82, %81 : vector<8x32xf32>
    %87 = arith.addf %85, %86 : vector<8x32xf32>
    %88 = math.tanh %87 : vector<8x32xf32>
    %89 = arith.mulf %84, %88 : vector<8x32xf32>
    %c24_31 = arith.constant 24 : index
    %c0_32 = arith.constant 0 : index
    %90 = vector.load %arg11[%c24_31, %c0_32] : memref<64x32xf32, #tpu.memory_space<vmem>>, vector<8x32xf32>
    tpu.vector_store %arg11[%c24_31, %c0_32], %89 {strides = array<i32>} : memref<64x32xf32, #tpu.memory_space<vmem>>, vector<8x32xf32>,
    %c32 = arith.constant 32 : index
    %c0_33 = arith.constant 0 : index
    %91 = vector.load %arg12[%c32, %c0_33] : memref<64x128xf32, #tpu.memory_space<vmem>>, vector<8x128xf32>
    %cst_34 = arith.constant dense<0.000000e+00> : vector<8x128xf32>
    %92 = tpu.matmul %89, %8, %cst_34 {dimension_numbers = #tpu.dot_dimension_numbers<[1], [0], [0], [1], [0, 0, 1, 1], [], []>} : vector<8x32xf32>, vector<32x128xf32>, vector<8x128xf32> -> vector<8x128xf32>
    %93 = arith.addf %91, %92 : vector<8x128xf32>
    %94 = vector.extract_strided_slice %93 {offsets = [0, 0], sizes = [8, 96], strides = [1, 1]} : vector<8x128xf32> to vector<8x96xf32>
    %95 = arith.negf %94 : vector<8x96xf32>
    %96 = math.exp %95 : vector<8x96xf32>
    %cst_35 = arith.constant 1.000000e+00 : f32
    %97 = vector.broadcast %cst_35 : f32 to vector<8x96xf32>
    %98 = arith.addf %97, %96 : vector<8x96xf32>
    %99 = arith.divf %97, %98 : vector<8x96xf32>
    %100 = vector.extract_strided_slice %93 {offsets = [0, 96], sizes = [8, 32], strides = [1, 1]} : vector<8x128xf32> to vector<8x32xf32>
    %101 = math.tanh %100 : vector<8x32xf32>
    %102 = vector.extract_strided_slice %99 {offsets = [0, 0], sizes = [8, 32], strides = [1, 1]} : vector<8x96xf32> to vector<8x32xf32>
    %103 = vector.extract_strided_slice %99 {offsets = [0, 32], sizes = [8, 32], strides = [1, 1]} : vector<8x96xf32> to vector<8x32xf32>
    %104 = vector.extract_strided_slice %99 {offsets = [0, 64], sizes = [8, 32], strides = [1, 1]} : vector<8x96xf32> to vector<8x32xf32>
    %105 = arith.mulf %103, %87 : vector<8x32xf32>
    %106 = arith.mulf %102, %101 : vector<8x32xf32>
    %107 = arith.addf %105, %106 : vector<8x32xf32>
    %108 = math.tanh %107 : vector<8x32xf32>
    %109 = arith.mulf %104, %108 : vector<8x32xf32>
    %c32_36 = arith.constant 32 : index
    %c0_37 = arith.constant 0 : index
    %110 = vector.load %arg11[%c32_36, %c0_37] : memref<64x32xf32, #tpu.memory_space<vmem>>, vector<8x32xf32>
    tpu.vector_store %arg11[%c32_36, %c0_37], %109 {strides = array<i32>} : memref<64x32xf32, #tpu.memory_space<vmem>>, vector<8x32xf32>,
    %c40 = arith.constant 40 : index
    %c0_38 = arith.constant 0 : index
    %111 = vector.load %arg12[%c40, %c0_38] : memref<64x128xf32, #tpu.memory_space<vmem>>, vector<8x128xf32>
    %cst_39 = arith.constant dense<0.000000e+00> : vector<8x128xf32>
    %112 = tpu.matmul %109, %8, %cst_39 {dimension_numbers = #tpu.dot_dimension_numbers<[1], [0], [0], [1], [0, 0, 1, 1], [], []>} : vector<8x32xf32>, vector<32x128xf32>, vector<8x128xf32> -> vector<8x128xf32>
    %113 = arith.addf %111, %112 : vector<8x128xf32>
    %114 = vector.extract_strided_slice %113 {offsets = [0, 0], sizes = [8, 96], strides = [1, 1]} : vector<8x128xf32> to vector<8x96xf32>
    %115 = arith.negf %114 : vector<8x96xf32>
    %116 = math.exp %115 : vector<8x96xf32>
    %cst_40 = arith.constant 1.000000e+00 : f32
    %117 = vector.broadcast %cst_40 : f32 to vector<8x96xf32>
    %118 = arith.addf %117, %116 : vector<8x96xf32>
    %119 = arith.divf %117, %118 : vector<8x96xf32>
    %120 = vector.extract_strided_slice %113 {offsets = [0, 96], sizes = [8, 32], strides = [1, 1]} : vector<8x128xf32> to vector<8x32xf32>
    %121 = math.tanh %120 : vector<8x32xf32>
    %122 = vector.extract_strided_slice %119 {offsets = [0, 0], sizes = [8, 32], strides = [1, 1]} : vector<8x96xf32> to vector<8x32xf32>
    %123 = vector.extract_strided_slice %119 {offsets = [0, 32], sizes = [8, 32], strides = [1, 1]} : vector<8x96xf32> to vector<8x32xf32>
    %124 = vector.extract_strided_slice %119 {offsets = [0, 64], sizes = [8, 32], strides = [1, 1]} : vector<8x96xf32> to vector<8x32xf32>
    %125 = arith.mulf %123, %107 : vector<8x32xf32>
    %126 = arith.mulf %122, %121 : vector<8x32xf32>
    %127 = arith.addf %125, %126 : vector<8x32xf32>
    %128 = math.tanh %127 : vector<8x32xf32>
    %129 = arith.mulf %124, %128 : vector<8x32xf32>
    %c40_41 = arith.constant 40 : index
    %c0_42 = arith.constant 0 : index
    %130 = vector.load %arg11[%c40_41, %c0_42] : memref<64x32xf32, #tpu.memory_space<vmem>>, vector<8x32xf32>
    tpu.vector_store %arg11[%c40_41, %c0_42], %129 {strides = array<i32>} : memref<64x32xf32, #tpu.memory_space<vmem>>, vector<8x32xf32>,
    %c48 = arith.constant 48 : index
    %c0_43 = arith.constant 0 : index
    %131 = vector.load %arg12[%c48, %c0_43] : memref<64x128xf32, #tpu.memory_space<vmem>>, vector<8x128xf32>
    %cst_44 = arith.constant dense<0.000000e+00> : vector<8x128xf32>
    %132 = tpu.matmul %129, %8, %cst_44 {dimension_numbers = #tpu.dot_dimension_numbers<[1], [0], [0], [1], [0, 0, 1, 1], [], []>} : vector<8x32xf32>, vector<32x128xf32>, vector<8x128xf32> -> vector<8x128xf32>
    %133 = arith.addf %131, %132 : vector<8x128xf32>
    %134 = vector.extract_strided_slice %133 {offsets = [0, 0], sizes = [8, 96], strides = [1, 1]} : vector<8x128xf32> to vector<8x96xf32>
    %135 = arith.negf %134 : vector<8x96xf32>
    %136 = math.exp %135 : vector<8x96xf32>
    %cst_45 = arith.constant 1.000000e+00 : f32
    %137 = vector.broadcast %cst_45 : f32 to vector<8x96xf32>
    %138 = arith.addf %137, %136 : vector<8x96xf32>
    %139 = arith.divf %137, %138 : vector<8x96xf32>
    %140 = vector.extract_strided_slice %133 {offsets = [0, 96], sizes = [8, 32], strides = [1, 1]} : vector<8x128xf32> to vector<8x32xf32>
    %141 = math.tanh %140 : vector<8x32xf32>
    %142 = vector.extract_strided_slice %139 {offsets = [0, 0], sizes = [8, 32], strides = [1, 1]} : vector<8x96xf32> to vector<8x32xf32>
    %143 = vector.extract_strided_slice %139 {offsets = [0, 32], sizes = [8, 32], strides = [1, 1]} : vector<8x96xf32> to vector<8x32xf32>
    %144 = vector.extract_strided_slice %139 {offsets = [0, 64], sizes = [8, 32], strides = [1, 1]} : vector<8x96xf32> to vector<8x32xf32>
    %145 = arith.mulf %143, %127 : vector<8x32xf32>
    %146 = arith.mulf %142, %141 : vector<8x32xf32>
    %147 = arith.addf %145, %146 : vector<8x32xf32>
    %148 = math.tanh %147 : vector<8x32xf32>
    %149 = arith.mulf %144, %148 : vector<8x32xf32>
    %c48_46 = arith.constant 48 : index
    %c0_47 = arith.constant 0 : index
    %150 = vector.load %arg11[%c48_46, %c0_47] : memref<64x32xf32, #tpu.memory_space<vmem>>, vector<8x32xf32>
    tpu.vector_store %arg11[%c48_46, %c0_47], %149 {strides = array<i32>} : memref<64x32xf32, #tpu.memory_space<vmem>>, vector<8x32xf32>,
    %c56 = arith.constant 56 : index
    %c0_48 = arith.constant 0 : index
    %151 = vector.load %arg12[%c56, %c0_48] : memref<64x128xf32, #tpu.memory_space<vmem>>, vector<8x128xf32>
    %cst_49 = arith.constant dense<0.000000e+00> : vector<8x128xf32>
    %152 = tpu.matmul %149, %8, %cst_49 {dimension_numbers = #tpu.dot_dimension_numbers<[1], [0], [0], [1], [0, 0, 1, 1], [], []>} : vector<8x32xf32>, vector<32x128xf32>, vector<8x128xf32> -> vector<8x128xf32>
    %153 = arith.addf %151, %152 : vector<8x128xf32>
    %154 = vector.extract_strided_slice %153 {offsets = [0, 0], sizes = [8, 96], strides = [1, 1]} : vector<8x128xf32> to vector<8x96xf32>
    %155 = arith.negf %154 : vector<8x96xf32>
    %156 = math.exp %155 : vector<8x96xf32>
    %cst_50 = arith.constant 1.000000e+00 : f32
    %157 = vector.broadcast %cst_50 : f32 to vector<8x96xf32>
    %158 = arith.addf %157, %156 : vector<8x96xf32>
    %159 = arith.divf %157, %158 : vector<8x96xf32>
    %160 = vector.extract_strided_slice %153 {offsets = [0, 96], sizes = [8, 32], strides = [1, 1]} : vector<8x128xf32> to vector<8x32xf32>
    %161 = math.tanh %160 : vector<8x32xf32>
    %162 = vector.extract_strided_slice %159 {offsets = [0, 0], sizes = [8, 32], strides = [1, 1]} : vector<8x96xf32> to vector<8x32xf32>
    %163 = vector.extract_strided_slice %159 {offsets = [0, 32], sizes = [8, 32], strides = [1, 1]} : vector<8x96xf32> to vector<8x32xf32>
    %164 = vector.extract_strided_slice %159 {offsets = [0, 64], sizes = [8, 32], strides = [1, 1]} : vector<8x96xf32> to vector<8x32xf32>
    %165 = arith.mulf %163, %147 : vector<8x32xf32>
    %166 = arith.mulf %162, %161 : vector<8x32xf32>
    %167 = arith.addf %165, %166 : vector<8x32xf32>
    %168 = math.tanh %167 : vector<8x32xf32>
    %169 = arith.mulf %164, %168 : vector<8x32xf32>
    %c56_51 = arith.constant 56 : index
    %c0_52 = arith.constant 0 : index
    %170 = vector.load %arg11[%c56_51, %c0_52] : memref<64x32xf32, #tpu.memory_space<vmem>>, vector<8x32xf32>
    tpu.vector_store %arg11[%c56_51, %c0_52], %169 {strides = array<i32>} : memref<64x32xf32, #tpu.memory_space<vmem>>, vector<8x32xf32>,
    %c0_53 = arith.constant 0 : index
    %c0_54 = arith.constant 0 : index
    %171 = vector.load %arg11[%c0_53, %c0_54] : memref<64x32xf32, #tpu.memory_space<vmem>>, vector<64x32xf32>
    %c0_55 = arith.constant 0 : index
    %c0_56 = arith.constant 0 : index
    %172 = vector.load %arg5[%c0_55, %c0_56] : memref<32x128xf32, #tpu.memory_space<vmem>>, vector<32x128xf32>
    %cst_57 = arith.constant dense<0.000000e+00> : vector<64x128xf32>
    %173 = tpu.matmul %171, %172, %cst_57 {dimension_numbers = #tpu.dot_dimension_numbers<[1], [0], [0], [1], [0, 0, 1, 1], [], []>} : vector<64x32xf32>, vector<32x128xf32>, vector<64x128xf32> -> vector<64x128xf32>
    %c0_58 = arith.constant 0 : index
    %c0_59 = arith.constant 0 : index
    %174 = vector.load %arg7[%c0_58, %c0_59] : memref<1x128xf32, #tpu.memory_space<vmem>>, vector<1x128xf32>
    %175 = vector.broadcast %174 : vector<1x128xf32> to vector<64x128xf32>
    %176 = arith.addf %173, %175 : vector<64x128xf32>
    %c0_60 = arith.constant 0 : index
    %c0_61 = arith.constant 0 : index
    %177 = vector.load %arg12[%c0_60, %c0_61] : memref<64x128xf32, #tpu.memory_space<vmem>>, vector<64x128xf32>
    tpu.vector_store %arg12[%c0_60, %c0_61], %176 {strides = array<i32>} : memref<64x128xf32, #tpu.memory_space<vmem>>, vector<64x128xf32>,
    %c0_62 = arith.constant 0 : index
    %c0_63 = arith.constant 0 : index
    %178 = vector.load %arg6[%c0_62, %c0_63] : memref<32x128xf32, #tpu.memory_space<vmem>>, vector<32x128xf32>
    %cst_64 = arith.constant 0.000000e+00 : f32
    %179 = vector.broadcast %cst_64 : f32 to vector<8x32xf32>
    %cst_65 = arith.constant 0.000000e+00 : f32
    %180 = vector.broadcast %cst_65 : f32 to vector<8x32xf32>
    %c0_66 = arith.constant 0 : index
    %c0_67 = arith.constant 0 : index
    %181 = vector.load %arg12[%c0_66, %c0_67] : memref<64x128xf32, #tpu.memory_space<vmem>>, vector<8x128xf32>
    %cst_68 = arith.constant dense<0.000000e+00> : vector<8x128xf32>
    %182 = tpu.matmul %179, %178, %cst_68 {dimension_numbers = #tpu.dot_dimension_numbers<[1], [0], [0], [1], [0, 0, 1, 1], [], []>} : vector<8x32xf32>, vector<32x128xf32>, vector<8x128xf32> -> vector<8x128xf32>
    %183 = arith.addf %181, %182 : vector<8x128xf32>
    %184 = vector.extract_strided_slice %183 {offsets = [0, 0], sizes = [8, 96], strides = [1, 1]} : vector<8x128xf32> to vector<8x96xf32>
    %185 = arith.negf %184 : vector<8x96xf32>
    %186 = math.exp %185 : vector<8x96xf32>
    %cst_69 = arith.constant 1.000000e+00 : f32
    %187 = vector.broadcast %cst_69 : f32 to vector<8x96xf32>
    %188 = arith.addf %187, %186 : vector<8x96xf32>
    %189 = arith.divf %187, %188 : vector<8x96xf32>
    %190 = vector.extract_strided_slice %183 {offsets = [0, 96], sizes = [8, 32], strides = [1, 1]} : vector<8x128xf32> to vector<8x32xf32>
    %191 = math.tanh %190 : vector<8x32xf32>
    %192 = vector.extract_strided_slice %189 {offsets = [0, 0], sizes = [8, 32], strides = [1, 1]} : vector<8x96xf32> to vector<8x32xf32>
    %193 = vector.extract_strided_slice %189 {offsets = [0, 32], sizes = [8, 32], strides = [1, 1]} : vector<8x96xf32> to vector<8x32xf32>
    %194 = vector.extract_strided_slice %189 {offsets = [0, 64], sizes = [8, 32], strides = [1, 1]} : vector<8x96xf32> to vector<8x32xf32>
    %195 = arith.mulf %193, %180 : vector<8x32xf32>
    %196 = arith.mulf %192, %191 : vector<8x32xf32>
    %197 = arith.addf %195, %196 : vector<8x32xf32>
    %198 = math.tanh %197 : vector<8x32xf32>
    %199 = arith.mulf %194, %198 : vector<8x32xf32>
    %c8_70 = arith.constant 8 : index
    %c0_71 = arith.constant 0 : index
    %200 = vector.load %arg12[%c8_70, %c0_71] : memref<64x128xf32, #tpu.memory_space<vmem>>, vector<8x128xf32>
    %cst_72 = arith.constant dense<0.000000e+00> : vector<8x128xf32>
    %201 = tpu.matmul %199, %178, %cst_72 {dimension_numbers = #tpu.dot_dimension_numbers<[1], [0], [0], [1], [0, 0, 1, 1], [], []>} : vector<8x32xf32>, vector<32x128xf32>, vector<8x128xf32> -> vector<8x128xf32>
    %202 = arith.addf %200, %201 : vector<8x128xf32>
    %203 = vector.extract_strided_slice %202 {offsets = [0, 0], sizes = [8, 96], strides = [1, 1]} : vector<8x128xf32> to vector<8x96xf32>
    %204 = arith.negf %203 : vector<8x96xf32>
    %205 = math.exp %204 : vector<8x96xf32>
    %cst_73 = arith.constant 1.000000e+00 : f32
    %206 = vector.broadcast %cst_73 : f32 to vector<8x96xf32>
    %207 = arith.addf %206, %205 : vector<8x96xf32>
    %208 = arith.divf %206, %207 : vector<8x96xf32>
    %209 = vector.extract_strided_slice %202 {offsets = [0, 96], sizes = [8, 32], strides = [1, 1]} : vector<8x128xf32> to vector<8x32xf32>
    %210 = math.tanh %209 : vector<8x32xf32>
    %211 = vector.extract_strided_slice %208 {offsets = [0, 0], sizes = [8, 32], strides = [1, 1]} : vector<8x96xf32> to vector<8x32xf32>
    %212 = vector.extract_strided_slice %208 {offsets = [0, 32], sizes = [8, 32], strides = [1, 1]} : vector<8x96xf32> to vector<8x32xf32>
    %213 = vector.extract_strided_slice %208 {offsets = [0, 64], sizes = [8, 32], strides = [1, 1]} : vector<8x96xf32> to vector<8x32xf32>
    %214 = arith.mulf %212, %197 : vector<8x32xf32>
    %215 = arith.mulf %211, %210 : vector<8x32xf32>
    %216 = arith.addf %214, %215 : vector<8x32xf32>
    %217 = math.tanh %216 : vector<8x32xf32>
    %218 = arith.mulf %213, %217 : vector<8x32xf32>
    %c16_74 = arith.constant 16 : index
    %c0_75 = arith.constant 0 : index
    %219 = vector.load %arg12[%c16_74, %c0_75] : memref<64x128xf32, #tpu.memory_space<vmem>>, vector<8x128xf32>
    %cst_76 = arith.constant dense<0.000000e+00> : vector<8x128xf32>
    %220 = tpu.matmul %218, %178, %cst_76 {dimension_numbers = #tpu.dot_dimension_numbers<[1], [0], [0], [1], [0, 0, 1, 1], [], []>} : vector<8x32xf32>, vector<32x128xf32>, vector<8x128xf32> -> vector<8x128xf32>
    %221 = arith.addf %219, %220 : vector<8x128xf32>
    %222 = vector.extract_strided_slice %221 {offsets = [0, 0], sizes = [8, 96], strides = [1, 1]} : vector<8x128xf32> to vector<8x96xf32>
    %223 = arith.negf %222 : vector<8x96xf32>
    %224 = math.exp %223 : vector<8x96xf32>
    %cst_77 = arith.constant 1.000000e+00 : f32
    %225 = vector.broadcast %cst_77 : f32 to vector<8x96xf32>
    %226 = arith.addf %225, %224 : vector<8x96xf32>
    %227 = arith.divf %225, %226 : vector<8x96xf32>
    %228 = vector.extract_strided_slice %221 {offsets = [0, 96], sizes = [8, 32], strides = [1, 1]} : vector<8x128xf32> to vector<8x32xf32>
    %229 = math.tanh %228 : vector<8x32xf32>
    %230 = vector.extract_strided_slice %227 {offsets = [0, 0], sizes = [8, 32], strides = [1, 1]} : vector<8x96xf32> to vector<8x32xf32>
    %231 = vector.extract_strided_slice %227 {offsets = [0, 32], sizes = [8, 32], strides = [1, 1]} : vector<8x96xf32> to vector<8x32xf32>
    %232 = vector.extract_strided_slice %227 {offsets = [0, 64], sizes = [8, 32], strides = [1, 1]} : vector<8x96xf32> to vector<8x32xf32>
    %233 = arith.mulf %231, %216 : vector<8x32xf32>
    %234 = arith.mulf %230, %229 : vector<8x32xf32>
    %235 = arith.addf %233, %234 : vector<8x32xf32>
    %236 = math.tanh %235 : vector<8x32xf32>
    %237 = arith.mulf %232, %236 : vector<8x32xf32>
    %c24_78 = arith.constant 24 : index
    %c0_79 = arith.constant 0 : index
    %238 = vector.load %arg12[%c24_78, %c0_79] : memref<64x128xf32, #tpu.memory_space<vmem>>, vector<8x128xf32>
    %cst_80 = arith.constant dense<0.000000e+00> : vector<8x128xf32>
    %239 = tpu.matmul %237, %178, %cst_80 {dimension_numbers = #tpu.dot_dimension_numbers<[1], [0], [0], [1], [0, 0, 1, 1], [], []>} : vector<8x32xf32>, vector<32x128xf32>, vector<8x128xf32> -> vector<8x128xf32>
    %240 = arith.addf %238, %239 : vector<8x128xf32>
    %241 = vector.extract_strided_slice %240 {offsets = [0, 0], sizes = [8, 96], strides = [1, 1]} : vector<8x128xf32> to vector<8x96xf32>
    %242 = arith.negf %241 : vector<8x96xf32>
    %243 = math.exp %242 : vector<8x96xf32>
    %cst_81 = arith.constant 1.000000e+00 : f32
    %244 = vector.broadcast %cst_81 : f32 to vector<8x96xf32>
    %245 = arith.addf %244, %243 : vector<8x96xf32>
    %246 = arith.divf %244, %245 : vector<8x96xf32>
    %247 = vector.extract_strided_slice %240 {offsets = [0, 96], sizes = [8, 32], strides = [1, 1]} : vector<8x128xf32> to vector<8x32xf32>
    %248 = math.tanh %247 : vector<8x32xf32>
    %249 = vector.extract_strided_slice %246 {offsets = [0, 0], sizes = [8, 32], strides = [1, 1]} : vector<8x96xf32> to vector<8x32xf32>
    %250 = vector.extract_strided_slice %246 {offsets = [0, 32], sizes = [8, 32], strides = [1, 1]} : vector<8x96xf32> to vector<8x32xf32>
    %251 = vector.extract_strided_slice %246 {offsets = [0, 64], sizes = [8, 32], strides = [1, 1]} : vector<8x96xf32> to vector<8x32xf32>
    %252 = arith.mulf %250, %235 : vector<8x32xf32>
    %253 = arith.mulf %249, %248 : vector<8x32xf32>
    %254 = arith.addf %252, %253 : vector<8x32xf32>
    %255 = math.tanh %254 : vector<8x32xf32>
    %256 = arith.mulf %251, %255 : vector<8x32xf32>
    %c32_82 = arith.constant 32 : index
    %c0_83 = arith.constant 0 : index
    %257 = vector.load %arg12[%c32_82, %c0_83] : memref<64x128xf32, #tpu.memory_space<vmem>>, vector<8x128xf32>
    %cst_84 = arith.constant dense<0.000000e+00> : vector<8x128xf32>
    %258 = tpu.matmul %256, %178, %cst_84 {dimension_numbers = #tpu.dot_dimension_numbers<[1], [0], [0], [1], [0, 0, 1, 1], [], []>} : vector<8x32xf32>, vector<32x128xf32>, vector<8x128xf32> -> vector<8x128xf32>
    %259 = arith.addf %257, %258 : vector<8x128xf32>
    %260 = vector.extract_strided_slice %259 {offsets = [0, 0], sizes = [8, 96], strides = [1, 1]} : vector<8x128xf32> to vector<8x96xf32>
    %261 = arith.negf %260 : vector<8x96xf32>
    %262 = math.exp %261 : vector<8x96xf32>
    %cst_85 = arith.constant 1.000000e+00 : f32
    %263 = vector.broadcast %cst_85 : f32 to vector<8x96xf32>
    %264 = arith.addf %263, %262 : vector<8x96xf32>
    %265 = arith.divf %263, %264 : vector<8x96xf32>
    %266 = vector.extract_strided_slice %259 {offsets = [0, 96], sizes = [8, 32], strides = [1, 1]} : vector<8x128xf32> to vector<8x32xf32>
    %267 = math.tanh %266 : vector<8x32xf32>
    %268 = vector.extract_strided_slice %265 {offsets = [0, 0], sizes = [8, 32], strides = [1, 1]} : vector<8x96xf32> to vector<8x32xf32>
    %269 = vector.extract_strided_slice %265 {offsets = [0, 32], sizes = [8, 32], strides = [1, 1]} : vector<8x96xf32> to vector<8x32xf32>
    %270 = vector.extract_strided_slice %265 {offsets = [0, 64], sizes = [8, 32], strides = [1, 1]} : vector<8x96xf32> to vector<8x32xf32>
    %271 = arith.mulf %269, %254 : vector<8x32xf32>
    %272 = arith.mulf %268, %267 : vector<8x32xf32>
    %273 = arith.addf %271, %272 : vector<8x32xf32>
    %274 = math.tanh %273 : vector<8x32xf32>
    %275 = arith.mulf %270, %274 : vector<8x32xf32>
    %c40_86 = arith.constant 40 : index
    %c0_87 = arith.constant 0 : index
    %276 = vector.load %arg12[%c40_86, %c0_87] : memref<64x128xf32, #tpu.memory_space<vmem>>, vector<8x128xf32>
    %cst_88 = arith.constant dense<0.000000e+00> : vector<8x128xf32>
    %277 = tpu.matmul %275, %178, %cst_88 {dimension_numbers = #tpu.dot_dimension_numbers<[1], [0], [0], [1], [0, 0, 1, 1], [], []>} : vector<8x32xf32>, vector<32x128xf32>, vector<8x128xf32> -> vector<8x128xf32>
    %278 = arith.addf %276, %277 : vector<8x128xf32>
    %279 = vector.extract_strided_slice %278 {offsets = [0, 0], sizes = [8, 96], strides = [1, 1]} : vector<8x128xf32> to vector<8x96xf32>
    %280 = arith.negf %279 : vector<8x96xf32>
    %281 = math.exp %280 : vector<8x96xf32>
    %cst_89 = arith.constant 1.000000e+00 : f32
    %282 = vector.broadcast %cst_89 : f32 to vector<8x96xf32>
    %283 = arith.addf %282, %281 : vector<8x96xf32>
    %284 = arith.divf %282, %283 : vector<8x96xf32>
    %285 = vector.extract_strided_slice %278 {offsets = [0, 96], sizes = [8, 32], strides = [1, 1]} : vector<8x128xf32> to vector<8x32xf32>
    %286 = math.tanh %285 : vector<8x32xf32>
    %287 = vector.extract_strided_slice %284 {offsets = [0, 0], sizes = [8, 32], strides = [1, 1]} : vector<8x96xf32> to vector<8x32xf32>
    %288 = vector.extract_strided_slice %284 {offsets = [0, 32], sizes = [8, 32], strides = [1, 1]} : vector<8x96xf32> to vector<8x32xf32>
    %289 = vector.extract_strided_slice %284 {offsets = [0, 64], sizes = [8, 32], strides = [1, 1]} : vector<8x96xf32> to vector<8x32xf32>
    %290 = arith.mulf %288, %273 : vector<8x32xf32>
    %291 = arith.mulf %287, %286 : vector<8x32xf32>
    %292 = arith.addf %290, %291 : vector<8x32xf32>
    %293 = math.tanh %292 : vector<8x32xf32>
    %294 = arith.mulf %289, %293 : vector<8x32xf32>
    %c48_90 = arith.constant 48 : index
    %c0_91 = arith.constant 0 : index
    %295 = vector.load %arg12[%c48_90, %c0_91] : memref<64x128xf32, #tpu.memory_space<vmem>>, vector<8x128xf32>
    %cst_92 = arith.constant dense<0.000000e+00> : vector<8x128xf32>
    %296 = tpu.matmul %294, %178, %cst_92 {dimension_numbers = #tpu.dot_dimension_numbers<[1], [0], [0], [1], [0, 0, 1, 1], [], []>} : vector<8x32xf32>, vector<32x128xf32>, vector<8x128xf32> -> vector<8x128xf32>
    %297 = arith.addf %295, %296 : vector<8x128xf32>
    %298 = vector.extract_strided_slice %297 {offsets = [0, 0], sizes = [8, 96], strides = [1, 1]} : vector<8x128xf32> to vector<8x96xf32>
    %299 = arith.negf %298 : vector<8x96xf32>
    %300 = math.exp %299 : vector<8x96xf32>
    %cst_93 = arith.constant 1.000000e+00 : f32
    %301 = vector.broadcast %cst_93 : f32 to vector<8x96xf32>
    %302 = arith.addf %301, %300 : vector<8x96xf32>
    %303 = arith.divf %301, %302 : vector<8x96xf32>
    %304 = vector.extract_strided_slice %297 {offsets = [0, 96], sizes = [8, 32], strides = [1, 1]} : vector<8x128xf32> to vector<8x32xf32>
    %305 = math.tanh %304 : vector<8x32xf32>
    %306 = vector.extract_strided_slice %303 {offsets = [0, 0], sizes = [8, 32], strides = [1, 1]} : vector<8x96xf32> to vector<8x32xf32>
    %307 = vector.extract_strided_slice %303 {offsets = [0, 32], sizes = [8, 32], strides = [1, 1]} : vector<8x96xf32> to vector<8x32xf32>
    %308 = vector.extract_strided_slice %303 {offsets = [0, 64], sizes = [8, 32], strides = [1, 1]} : vector<8x96xf32> to vector<8x32xf32>
    %309 = arith.mulf %307, %292 : vector<8x32xf32>
    %310 = arith.mulf %306, %305 : vector<8x32xf32>
    %311 = arith.addf %309, %310 : vector<8x32xf32>
    %312 = math.tanh %311 : vector<8x32xf32>
    %313 = arith.mulf %308, %312 : vector<8x32xf32>
    %c56_94 = arith.constant 56 : index
    %c0_95 = arith.constant 0 : index
    %314 = vector.load %arg12[%c56_94, %c0_95] : memref<64x128xf32, #tpu.memory_space<vmem>>, vector<8x128xf32>
    %cst_96 = arith.constant dense<0.000000e+00> : vector<8x128xf32>
    %315 = tpu.matmul %313, %178, %cst_96 {dimension_numbers = #tpu.dot_dimension_numbers<[1], [0], [0], [1], [0, 0, 1, 1], [], []>} : vector<8x32xf32>, vector<32x128xf32>, vector<8x128xf32> -> vector<8x128xf32>
    %316 = arith.addf %314, %315 : vector<8x128xf32>
    %317 = vector.extract_strided_slice %316 {offsets = [0, 0], sizes = [8, 96], strides = [1, 1]} : vector<8x128xf32> to vector<8x96xf32>
    %318 = arith.negf %317 : vector<8x96xf32>
    %319 = math.exp %318 : vector<8x96xf32>
    %cst_97 = arith.constant 1.000000e+00 : f32
    %320 = vector.broadcast %cst_97 : f32 to vector<8x96xf32>
    %321 = arith.addf %320, %319 : vector<8x96xf32>
    %322 = arith.divf %320, %321 : vector<8x96xf32>
    %323 = vector.extract_strided_slice %316 {offsets = [0, 96], sizes = [8, 32], strides = [1, 1]} : vector<8x128xf32> to vector<8x32xf32>
    %324 = math.tanh %323 : vector<8x32xf32>
    %325 = vector.extract_strided_slice %322 {offsets = [0, 0], sizes = [8, 32], strides = [1, 1]} : vector<8x96xf32> to vector<8x32xf32>
    %326 = vector.extract_strided_slice %322 {offsets = [0, 32], sizes = [8, 32], strides = [1, 1]} : vector<8x96xf32> to vector<8x32xf32>
    %327 = vector.extract_strided_slice %322 {offsets = [0, 64], sizes = [8, 32], strides = [1, 1]} : vector<8x96xf32> to vector<8x32xf32>
    %328 = arith.mulf %326, %311 : vector<8x32xf32>
    %329 = arith.mulf %325, %324 : vector<8x32xf32>
    %330 = arith.addf %328, %329 : vector<8x32xf32>
    %331 = math.tanh %330 : vector<8x32xf32>
    %332 = arith.mulf %327, %331 : vector<8x32xf32>
    %c0_98 = arith.constant 0 : index
    %c0_99 = arith.constant 0 : index
    %333 = vector.load %arg8[%c0_98, %c0_99] : memref<32x128xf32, #tpu.memory_space<vmem>>, vector<32x128xf32>
    %cst_100 = arith.constant dense<0.000000e+00> : vector<8x128xf32>
    %334 = tpu.matmul %332, %333, %cst_100 {dimension_numbers = #tpu.dot_dimension_numbers<[1], [0], [0], [1], [0, 0, 1, 1], [], []>} : vector<8x32xf32>, vector<32x128xf32>, vector<8x128xf32> -> vector<8x128xf32>
    %c0_101 = arith.constant 0 : index
    %c0_102 = arith.constant 0 : index
    %335 = vector.load %arg9[%c0_101, %c0_102] : memref<1x128xf32, #tpu.memory_space<vmem>>, vector<1x128xf32>
    %336 = vector.broadcast %335 : vector<1x128xf32> to vector<8x128xf32>
    %337 = arith.addf %334, %336 : vector<8x128xf32>
    %c0_103 = arith.constant 0 : index
    %c0_104 = arith.constant 0 : index
    %c0_105 = arith.constant 0 : index
    %338 = vector.load %arg10[%c0_103, %c0_104, %c0_105] : memref<1x8x128xf32, #tpu.memory_space<vmem>>, vector<1x8x128xf32>
    %339 = vector.shape_cast %338 : vector<1x8x128xf32> to vector<8x128xf32>
    %340 = vector.shape_cast %337 : vector<8x128xf32> to vector<1x8x128xf32>
    tpu.vector_store %arg10[%c0_103, %c0_104, %c0_105], %340 {strides = array<i32>} : memref<1x8x128xf32, #tpu.memory_space<vmem>>, vector<1x8x128xf32>,
    return
  }
  func.func @transform_0(%arg0: i32) -> (i32, i32, i32) {
    %c0_i32 = arith.constant 0 : i32
    %c0_i32_0 = arith.constant 0 : i32
    %c0_i32_1 = arith.constant 0 : i32
    return %arg0, %c0_i32, %c0_i32_0 : i32, i32, i32
  }
  func.func @transform_1(%arg0: i32) -> (i32, i32) {
    %c0_i32 = arith.constant 0 : i32
    %c0_i32_0 = arith.constant 0 : i32
    %c0_i32_1 = arith.constant 0 : i32
    return %c0_i32, %c0_i32_0 : i32, i32
  }
  func.func @transform_2(%arg0: i32) -> (i32, i32) {
    %c0_i32 = arith.constant 0 : i32
    %c0_i32_0 = arith.constant 0 : i32
    %c0_i32_1 = arith.constant 0 : i32
    return %c0_i32, %c0_i32_0 : i32, i32
  }
  func.func @transform_3(%arg0: i32) -> (i32, i32) {
    %c0_i32 = arith.constant 0 : i32
    %c0_i32_0 = arith.constant 0 : i32
    %c0_i32_1 = arith.constant 0 : i32
    return %c0_i32, %c0_i32_0 : i32, i32
  }
  func.func @transform_4(%arg0: i32) -> (i32, i32) {
    %c0_i32 = arith.constant 0 : i32
    %c0_i32_0 = arith.constant 0 : i32
    %c0_i32_1 = arith.constant 0 : i32
    return %c0_i32, %c0_i32_0 : i32, i32
  }
  func.func @transform_5(%arg0: i32) -> (i32, i32) {
    %c0_i32 = arith.constant 0 : i32
    %c0_i32_0 = arith.constant 0 : i32
    %c0_i32_1 = arith.constant 0 : i32
    return %c0_i32, %c0_i32_0 : i32, i32
  }
  func.func @transform_6(%arg0: i32) -> (i32, i32) {
    %c0_i32 = arith.constant 0 : i32
    %c0_i32_0 = arith.constant 0 : i32
    %c0_i32_1 = arith.constant 0 : i32
    return %c0_i32, %c0_i32_0 : i32, i32
  }
  func.func @transform_7(%arg0: i32) -> (i32, i32) {
    %c0_i32 = arith.constant 0 : i32
    %c0_i32_0 = arith.constant 0 : i32
    %c0_i32_1 = arith.constant 0 : i32
    return %c0_i32, %c0_i32_0 : i32, i32
  }
  func.func @transform_8(%arg0: i32) -> (i32, i32) {
    %c0_i32 = arith.constant 0 : i32
    %c0_i32_0 = arith.constant 0 : i32
    %c0_i32_1 = arith.constant 0 : i32
    return %c0_i32, %c0_i32_0 : i32, i32
  }
  func.func @transform_9(%arg0: i32) -> (i32, i32, i32) {
    %c0_i32 = arith.constant 0 : i32
    %c0_i32_0 = arith.constant 0 : i32
    %c0_i32_1 = arith.constant 0 : i32
    return %arg0, %c0_i32, %c0_i32_0 : i32, i32, i32
  }
}

</mosaic_0001>

<llo_original>
// kernel: tpu_custom_call.1
$region0: #{tpu_custom_call.1}
  #allocation0 [shape = 'u32[]', space=smem, size = 0x4, offset = 0x4, fixed_abs, tag = 'smem constant byte address 0x4 - core index']
  #allocation1 [shape = 'u32[144,128]{1,0:T(1,128)}', space=vmem, size = 0x12000, scoped, tag = 'internal scratch']
  #allocation2 [shape = 'f32[64,32]{1,0:T(8,128)}', space=vmem, size = 0x8000, scoped, tag = 'scratch operand']
  #allocation3 [shape = 'f32[64,128]{1,0:T(8,128)}', space=vmem, size = 0x8000, scoped, tag = 'scratch operand']
  %s0 = inlined_call_operand.vmem [shape: f32[1,64,4], index: 0, kind: input, shape index: {}]
  %s1 = inlined_call_operand.vmem [shape: f32[4,128], index: 1, kind: input, shape index: {}]
  %s2 = inlined_call_operand.vmem [shape: f32[32,128], index: 2, kind: input, shape index: {}]
  %s3 = inlined_call_operand.vmem [shape: f32[1,128], index: 3, kind: input, shape index: {}]
  %s4 = inlined_call_operand.vmem [shape: f32[32,128], index: 4, kind: input, shape index: {}]
  %s5 = inlined_call_operand.hbm [shape: f32[32,128], index: 5, kind: input, shape index: {}]
  %s6 = inlined_call_operand.vmem [shape: f32[1,128], index: 6, kind: input, shape index: {}]
  %s7 = inlined_call_operand.hbm [shape: f32[32,128], index: 7, kind: input, shape index: {}]
  %s8 = inlined_call_operand.vmem [shape: f32[1,128], index: 8, kind: input, shape index: {}]
  %s9 = inlined_call_operand.hbm [shape: f32[1,8,128], index: 9, kind: output, shape index: {}]
  %s10 = sld [smem:[#allocation0]]
  $region54: #{tpu_custom_call.1} parent=0
    _
  %s12 = ssub.s32 1, %s10
  %s13 = scalar_select 0, %s12, %s10
  $region1: #{tpu_custom_call.1} parent=0
    #allocation4 [shape = 'u8[16384]{0}', space=vmem, size = 0x4000, scoped, tag = 'input window, operand 5, single buffered']
    #allocation5 [shape = 's32[1]{0}', space=sflag, size = 0x4, scoped, tag = 'scoped memory for tpu_custom_call.1']
    #allocation6 [shape = 's32[1]{0}', space=sflag, size = 0x4, scoped, tag = 'scoped memory for tpu_custom_call.1']
    #allocation7 [shape = 'u8[16384]{0}', space=vmem, size = 0x4000, scoped, tag = 'input window, operand 7, single buffered']
    #allocation8 [shape = 's32[1]{0}', space=sflag, size = 0x4, scoped, tag = 'scoped memory for tpu_custom_call.1']
    #allocation9 [shape = 'u8[4096]{0}', space=vmem, size = 0x1000, scoped, tag = 'output window, operand 0, single buffered']
    %14 = vsyncpa [#allocation5], 0
    %15 = vsyncpa [#allocation8], 0
    %16 = vsyncpa [#allocation6], 0
    // Predicated region
    $region2: #{tpu_custom_call.1} parent=1 // pred_check
      _
    $region3: #{tpu_custom_call.1} parent=1 // pred_check_branch
      %18 = sbr.rel (0) target = $region5
    $region4: #{tpu_custom_call.1} parent=1 // pred_region
      _
    $region5: #{tpu_custom_call.1} parent=1 // pred_fallthru
      _
    // Predicated region
    $region6: #{tpu_custom_call.1} parent=1 // pred_check
      _
    $region7: #{tpu_custom_call.1} parent=1 // pred_check_branch
      %20 = sbr.rel (0) target = $region9
    $region8: #{tpu_custom_call.1} parent=1 // pred_region
      _
    $region9: #{tpu_custom_call.1} parent=1 // pred_fallthru
      _
    // Predicated region
    $region10: #{tpu_custom_call.1} parent=1 // pred_check
      _
    $region11: #{tpu_custom_call.1} parent=1 // pred_check_branch
      %22 = sbr.rel (0) target = $region13
    $region12: #{tpu_custom_call.1} parent=1 // pred_region
      _
    $region13: #{tpu_custom_call.1} parent=1 // pred_fallthru
      _
    // Predicated region
    $region14: #{tpu_custom_call.1} parent=1 // pred_check
      _
    $region15: #{tpu_custom_call.1} parent=1 // pred_check_branch
      %24 = sbr.rel (0) target = $region17
    $region16: #{tpu_custom_call.1} parent=1 // pred_region
      _
    $region17: #{tpu_custom_call.1} parent=1 // pred_fallthru
      _
    // Predicated region
    $region18: #{tpu_custom_call.1} parent=1 // pred_check
      _
    $region19: #{tpu_custom_call.1} parent=1 // pred_check_branch
      %26 = sbr.rel (0) target = $region21
    $region20: #{tpu_custom_call.1} parent=1 // pred_region
      _
    $region21: #{tpu_custom_call.1} parent=1 // pred_fallthru
      _
    // Predicated region
    $region22: #{tpu_custom_call.1} parent=1 // pred_check
      _
    $region23: #{tpu_custom_call.1} parent=1 // pred_check_branch
      %28 = sbr.rel (0) target = $region25
    $region24: #{tpu_custom_call.1} parent=1 // pred_region
      %s30 = ssub.s32 512, 512
      %31 = vsyncadd [#allocation5], %s30
      %s32 = sshll.u32 [#allocation4], 4
      %s33 = int_to_ptr.vmem [resolvable:$true] %s32
      %38 = dma.hbm_to_vmem [thread:$0]  %s5, 512, %s33, [#allocation5], 128, 128, 8
    $region25: #{tpu_custom_call.1} parent=1 // pred_fallthru
      _
    // Predicated region
    $region26: #{tpu_custom_call.1} parent=1 // pred_check
      _
    $region27: #{tpu_custom_call.1} parent=1 // pred_check_branch
      %40 = sbr.rel (0) target = $region29
    $region28: #{tpu_custom_call.1} parent=1 // pred_region
      _
    $region29: #{tpu_custom_call.1} parent=1 // pred_fallthru
      _
    // Predicated region
    $region30: #{tpu_custom_call.1} parent=1 // pred_check
      _
    $region31: #{tpu_custom_call.1} parent=1 // pred_check_branch
      %42 = sbr.rel (0) target = $region33
    $region32: #{tpu_custom_call.1} parent=1 // pred_region
      %s44 = ssub.s32 512, 512
      %45 = vsyncadd [#allocation8], %s44
      %s46 = sshll.u32 [#allocation7], 4
      %s47 = int_to_ptr.vmem [resolvable:$true] %s46
      %52 = dma.hbm_to_vmem [thread:$0]  %s7, 512, %s47, [#allocation8], 128, 128, 8
    $region33: #{tpu_custom_call.1} parent=1 // pred_fallthru
      _
    // Predicated region
    $region34: #{tpu_custom_call.1} parent=1 // pred_check
      _
    $region35: #{tpu_custom_call.1} parent=1 // pred_check_branch
      %54 = sbr.rel (0) target = $region37
    $region36: #{tpu_custom_call.1} parent=1 // pred_region
      _
    $region37: #{tpu_custom_call.1} parent=1 // pred_fallthru
      _
    // Predicated region
    $region38: #{tpu_custom_call.1} parent=1 // pred_check
      _
    $region39: #{tpu_custom_call.1} parent=1 // pred_check_branch
      %56 = sbr.rel (0) target = $region41
    $region40: #{tpu_custom_call.1} parent=1 // pred_region
      %57 = dma.done [#allocation5], 512
    $region41: #{tpu_custom_call.1} parent=1 // pred_fallthru
      _
    // Predicated region
    $region42: #{tpu_custom_call.1} parent=1 // pred_check
      _
    $region43: #{tpu_custom_call.1} parent=1 // pred_check_branch
      %59 = sbr.rel (0) target = $region45
    $region44: #{tpu_custom_call.1} parent=1 // pred_region
      %60 = dma.done [#allocation8], 512
    $region45: #{tpu_custom_call.1} parent=1 // pred_fallthru
      _
    %v61 = vld [vmem:[%s0] sm:$0xff]
    %v62 = vld [vmem:[%s0 + $0x8] sm:$0xff]
    %v63 = vld [vmem:[%s0 + $0x10] sm:$0xff]
    %v64 = vld [vmem:[%s0 + $0x18] sm:$0xff]
    %v65 = vld [vmem:[%s0 + $0x20] sm:$0xff]
    %v66 = vld [vmem:[%s0 + $0x28] sm:$0xff]
    %v67 = vld [vmem:[%s0 + $0x30] sm:$0xff]
    %v68 = vld [vmem:[%s0 + $0x38] sm:$0xff]
    %v69 = vld [vmem:[%s1] sm:$0xf]
    %v70 = vld [vmem:[%s3] sm:$0x1]
    %v72 = vlaneseq
    %v73 = vshrl.u32 %v72, 7
    %v74 = vsub.s32 0, %v73
    %v75 = vrot.slane %v70, %v74
    %vm77 = vcmask 31744
    %v79 = vsel %vm77, %v61, 0
    %v82 = vsel %vm77, %v62, 0
    %v85 = vsel %vm77, %v63, 0
    %v88 = vsel %vm77, %v64, 0
    %v91 = vsel %vm77, %v65, 0
    %v94 = vsel %vm77, %v66, 0
    %v97 = vsel %vm77, %v67, 0
    %v100 = vsel %vm77, %v68, 0
    %vm102 = vcmask 1043456
    %v104 = vsel %vm102, %v69, 0
    %106 = vmatprep.subr.mxu0 0.0
    %107 = vmatpush1.msra.mxu0 0.0
    %108 = vmatprep.subr.mxu0 0.0
    %109 = vmatpush1.msra.mxu0 0.0
    %110 = vmatprep.subr.mxu0 0.0
    %111 = vmatpush1.msra.mxu0 0.0
    %112 = vmatprep.subr.mxu0 0.0
    %113 = vmatpush1.msra.mxu0 0.0
    %114 = vmatprep.subr.mxu0 0.0
    %115 = vmatpush1.msra.mxu0 0.0
    %116 = vmatprep.subr.mxu0 0.0
    %117 = vmatpush1.msra.mxu0 0.0
    %118 = vmatprep.subr.mxu0 0.0
    %119 = vmatpush1.msra.mxu0 0.0
    %120 = vmatprep.subr.mxu0 0.0
    %121 = vmatpush1.msra.mxu0 0.0
    %122 = vmatprep.subr.mxu0 0.0
    %123 = vmatpush1.msra.mxu0 0.0
    %124 = vmatprep.subr.mxu0 0.0
    %125 = vmatpush1.msra.mxu0 0.0
    %126 = vmatprep.subr.mxu0 0.0
    %127 = vmatpush1.msra.mxu0 0.0
    %128 = vmatprep.subr.mxu0 0.0
    %129 = vmatpush1.msra.mxu0 0.0
    %130 = vmatprep.subr.mxu0 0.0
    %131 = vmatpush1.msra.mxu0 0.0
    %132 = vmatprep.subr.mxu0 0.0
    %133 = vmatpush1.msra.mxu0 0.0
    %134 = vmatprep.subr.mxu0 0.0
    %135 = vmatpush1.msra.mxu0 0.0
    %136 = vmatprep.subr.mxu0 0.0
    %137 = vmatpush1.msra.mxu0 %v104
    %138 = vmatprep.subr.mxu0 0.0
    %139 = vmatpush2.msra.mxu0 0.0
    %140 = vmatprep.subr.mxu0 0.0
    %141 = vmatpush2.msra.mxu0 0.0
    %142 = vmatprep.subr.mxu0 0.0
    %143 = vmatpush2.msra.mxu0 0.0
    %144 = vmatprep.subr.mxu0 0.0
    %145 = vmatpush2.msra.mxu0 0.0
    %146 = vmatprep.subr.mxu0 0.0
    %147 = vmatpush2.msra.mxu0 0.0
    %148 = vmatprep.subr.mxu0 0.0
    %149 = vmatpush2.msra.mxu0 0.0
    %150 = vmatprep.subr.mxu0 0.0
    %151 = vmatpush2.msra.mxu0 0.0
    %152 = vmatprep.subr.mxu0 0.0
    %153 = vmatpush2.msra.mxu0 0.0
    %154 = vmatprep.subr.mxu0 0.0
    %155 = vmatpush2.msra.mxu0 0.0
    %156 = vmatprep.subr.mxu0 0.0
    %157 = vmatpush2.msra.mxu0 0.0
    %158 = vmatprep.subr.mxu0 0.0
    %159 = vmatpush2.msra.mxu0 0.0
    %160 = vmatprep.subr.mxu0 0.0
    %161 = vmatpush2.msra.mxu0 0.0
    %162 = vmatprep.subr.mxu0 0.0
    %163 = vmatpush2.msra.mxu0 0.0
    %164 = vmatprep.subr.mxu0 0.0
    %165 = vmatpush2.msra.mxu0 0.0
    %166 = vmatprep.subr.mxu0 0.0
    %167 = vmatpush2.msra.mxu0 0.0
    %168 = vmatprep.subr.mxu0 0.0
    %169 = vmatpush2.msra.mxu0 0.0
    %170 = vmatprep.mubr.f32.mxu0 0.0
    %171 = vmatmul.mubr.f32.gmra.mxu0 %v79
    %v172 = vpop.f32.mrf.mxu0
    %v173 = vadd.f32 %v75, %v172
    %v174 = vpop.f32.mrf.mxu0
    %175 = vmatprep.mubr.f32.mxu0 0.0
    %176 = vmatmul.mubr.f32.gmra.mxu0 %v82
    %v177 = vpop.f32.mrf.mxu0
    %v178 = vadd.f32 %v75, %v177
    %v179 = vpop.f32.mrf.mxu0
    %180 = vmatprep.mubr.f32.mxu0 0.0
    %181 = vmatmul.mubr.f32.gmra.mxu0 %v85
    %v182 = vpop.f32.mrf.mxu0
    %v183 = vadd.f32 %v75, %v182
    %v184 = vpop.f32.mrf.mxu0
    %185 = vmatprep.mubr.f32.mxu0 0.0
    %186 = vmatmul.mubr.f32.gmra.mxu0 %v88
    %v187 = vpop.f32.mrf.mxu0
    %v188 = vadd.f32 %v75, %v187
    %v189 = vpop.f32.mrf.mxu0
    %190 = vmatprep.mubr.f32.mxu0 0.0
    %191 = vmatmul.mubr.f32.gmra.mxu0 %v91
    %v192 = vpop.f32.mrf.mxu0
    %v193 = vadd.f32 %v75, %v192
    %v194 = vpop.f32.mrf.mxu0
    %195 = vmatprep.mubr.f32.mxu0 0.0
    %196 = vmatmul.mubr.f32.gmra.mxu0 %v94
    %v197 = vpop.f32.mrf.mxu0
    %v198 = vadd.f32 %v75, %v197
    %v199 = vpop.f32.mrf.mxu0
    %200 = vmatprep.mubr.f32.mxu0 0.0
    %201 = vmatmul.mubr.f32.gmra.mxu0 %v97
    %v202 = vpop.f32.mrf.mxu0
    %v203 = vadd.f32 %v75, %v202
    %v204 = vpop.f32.mrf.mxu0
    %205 = vmatprep.mubr.f32.mxu0 0.0
    %206 = vmatmul.mubr.f32.gmra.mxu0 %v100
    %v207 = vpop.f32.mrf.mxu0
    %v208 = vadd.f32 %v75, %v207
    %v209 = vpop.f32.mrf.mxu0
    %210 = vdwg.mxu0
    %211 = vst [vmem:[#allocation3] sm:$0xff] %v173
    %212 = vst [vmem:[#allocation3 + $0x8] sm:$0xff] %v178
    %213 = vst [vmem:[#allocation3 + $0x10] sm:$0xff] %v183
    %214 = vst [vmem:[#allocation3 + $0x18] sm:$0xff] %v188
    %215 = vst [vmem:[#allocation3 + $0x20] sm:$0xff] %v193
    %216 = vst [vmem:[#allocation3 + $0x28] sm:$0xff] %v198
    %217 = vst [vmem:[#allocation3 + $0x30] sm:$0xff] %v203
    %218 = vst [vmem:[#allocation3 + $0x38] sm:$0xff] %v208
    %v219 = vld [vmem:[%s2] sm:$0xff]
    %v220 = vld [vmem:[%s2 + $0x8] sm:$0xff]
    %v221 = vld [vmem:[%s2 + $0x10] sm:$0xff]
    %v222 = vld [vmem:[%s2 + $0x18] sm:$0xff]
    %v223 = vld [vmem:[#allocation3] sm:$0xff]
    %vm224 = vcmask 261120
    %v226 = vsel %vm224, 0.0, 0
    %228 = vmatprep.subr.mxu0 0.0
    %229 = vmatpush1.msra.mxu0 0.0
    %230 = vmatprep.subr.mxu0 0.0
    %231 = vmatpush1.msra.mxu0 0.0
    %232 = vmatprep.subr.mxu0 0.0
    %233 = vmatpush1.msra.mxu0 0.0
    %234 = vmatprep.subr.mxu0 0.0
    %235 = vmatpush1.msra.mxu0 0.0
    %236 = vmatprep.subr.mxu0 0.0
    %237 = vmatpush1.msra.mxu0 0.0
    %238 = vmatprep.subr.mxu0 0.0
    %239 = vmatpush1.msra.mxu0 0.0
    %240 = vmatprep.subr.mxu0 0.0
    %241 = vmatpush1.msra.mxu0 0.0
    %242 = vmatprep.subr.mxu0 0.0
    %243 = vmatpush1.msra.mxu0 0.0
    %244 = vmatprep.subr.mxu0 0.0
    %245 = vmatpush1.msra.mxu0 0.0
    %246 = vmatprep.subr.mxu0 0.0
    %247 = vmatpush1.msra.mxu0 0.0
    %248 = vmatprep.subr.mxu0 0.0
    %249 = vmatpush1.msra.mxu0 0.0
    %250 = vmatprep.subr.mxu0 0.0
    %251 = vmatpush1.msra.mxu0 0.0
    %252 = vmatprep.subr.mxu0 0.0
    %253 = vmatpush1.msra.mxu0 %v222
    %254 = vmatprep.subr.mxu0 0.0
    %255 = vmatpush1.msra.mxu0 %v221
    %256 = vmatprep.subr.mxu0 0.0
    %257 = vmatpush1.msra.mxu0 %v220
    %258 = vmatprep.subr.mxu0 0.0
    %259 = vmatpush1.msra.mxu0 %v219
    %260 = vmatprep.subr.mxu0 0.0
    %261 = vmatpush2.msra.mxu0 0.0
    %262 = vmatprep.subr.mxu0 0.0
    %263 = vmatpush2.msra.mxu0 0.0
    %264 = vmatprep.subr.mxu0 0.0
    %265 = vmatpush2.msra.mxu0 0.0
    %266 = vmatprep.subr.mxu0 0.0
    %267 = vmatpush2.msra.mxu0 0.0
    %268 = vmatprep.subr.mxu0 0.0
    %269 = vmatpush2.msra.mxu0 0.0
    %270 = vmatprep.subr.mxu0 0.0
    %271 = vmatpush2.msra.mxu0 0.0
    %272 = vmatprep.subr.mxu0 0.0
    %273 = vmatpush2.msra.mxu0 0.0
    %274 = vmatprep.subr.mxu0 0.0
    %275 = vmatpush2.msra.mxu0 0.0
    %276 = vmatprep.subr.mxu0 0.0
    %277 = vmatpush2.msra.mxu0 0.0
    %278 = vmatprep.subr.mxu0 0.0
    %279 = vmatpush2.msra.mxu0 0.0
    %280 = vmatprep.subr.mxu0 0.0
    %281 = vmatpush2.msra.mxu0 0.0
    %282 = vmatprep.subr.mxu0 0.0
    %283 = vmatpush2.msra.mxu0 0.0
    %284 = vmatprep.subr.mxu0 0.0
    %285 = vmatpush2.msra.mxu0 0.0
    %286 = vmatprep.subr.mxu0 0.0
    %287 = vmatpush2.msra.mxu0 0.0
    %288 = vmatprep.subr.mxu0 0.0
    %289 = vmatpush2.msra.mxu0 0.0
    %290 = vmatprep.subr.mxu0 0.0
    %291 = vmatpush2.msra.mxu0 0.0
    %292 = vmatprep.mubr.f32.mxu0 0.0
    %293 = vmatmul.mubr.f32.gmra.mxu0 %v226
    %v294 = vpop.f32.mrf.mxu0
    %v295 = vadd.f32 0.0, %v294
    %v296 = vpop.f32.mrf.mxu0
    %297 = vdwg.mxu0
    %v298 = vadd.f32 %v223, %v295
    %v299 = vxor.u32 %v298, 2147483648
    %v300 = vmul.f32 %v299, 1.442695
    %v301 = vpow.pop %v300
    %v302 = vadd.f32 %v301, 1.0
    %v303 = vrcp.pop %v302
    %v304 = vmul.f32 1.0, %v303
    %v305 = vtanh.pop %v298
    %v306 = vmul.f32 %v304, 0.0
    %308 = vrot.lane.b32.xlu0 %v305, 32
    %v309 = vpop.permute.xlu0 %308
    %v311 = vmul.f32 %v304, %v309
    %313 = vrot.lane.b32.xlu0 %v311, 32
    %v314 = vpop.permute.xlu0 %313
    %v316 = vadd.f32 %v306, %v314
    %v317 = vtanh.pop %v316
    %319 = vrot.lane.b32.xlu0 %v317, 32
    %v320 = vpop.permute.xlu0 %319
    %v322 = vmul.f32 %v304, %v320
    %324 = vrot.lane.b32.xlu0 %v322, 64
    %v325 = vpop.permute.xlu0 %324
    %327 = vst.msk [vmem:[#allocation2] sm:$0xff] %vm224, %v325
    %v328 = vld [vmem:[#allocation3 + $0x8] sm:$0xff]
    %v329 = vsel %vm224, %v325, 0
    %331 = vmatprep.subr.mxu0 0.0
    %332 = vmatpush1.msra.mxu0 0.0
    %333 = vmatprep.subr.mxu0 0.0
    %334 = vmatpush1.msra.mxu0 0.0
    %335 = vmatprep.subr.mxu0 0.0
    %336 = vmatpush1.msra.mxu0 0.0
    %337 = vmatprep.subr.mxu0 0.0
    %338 = vmatpush1.msra.mxu0 0.0
    %339 = vmatprep.subr.mxu0 0.0
    %340 = vmatpush1.msra.mxu0 0.0
    %341 = vmatprep.subr.mxu0 0.0
    %342 = vmatpush1.msra.mxu0 0.0
    %343 = vmatprep.subr.mxu0 0.0
    %344 = vmatpush1.msra.mxu0 0.0
    %345 = vmatprep.subr.mxu0 0.0
    %346 = vmatpush1.msra.mxu0 0.0
    %347 = vmatprep.subr.mxu0 0.0
    %348 = vmatpush1.msra.mxu0 0.0
    %349 = vmatprep.subr.mxu0 0.0
    %350 = vmatpush1.msra.mxu0 0.0
    %351 = vmatprep.subr.mxu0 0.0
    %352 = vmatpush1.msra.mxu0 0.0
    %353 = vmatprep.subr.mxu0 0.0
    %354 = vmatpush1.msra.mxu0 0.0
    %355 = vmatprep.subr.mxu0 0.0
    %356 = vmatpush1.msra.mxu0 %v222
    %357 = vmatprep.subr.mxu0 0.0
    %358 = vmatpush1.msra.mxu0 %v221
    %359 = vmatprep.subr.mxu0 0.0
    %360 = vmatpush1.msra.mxu0 %v220
    %361 = vmatprep.subr.mxu0 0.0
    %362 = vmatpush1.msra.mxu0 %v219
    %363 = vmatprep.subr.mxu0 0.0
    %364 = vmatpush2.msra.mxu0 0.0
    %365 = vmatprep.subr.mxu0 0.0
    %366 = vmatpush2.msra.mxu0 0.0
    %367 = vmatprep.subr.mxu0 0.0
    %368 = vmatpush2.msra.mxu0 0.0
    %369 = vmatprep.subr.mxu0 0.0
    %370 = vmatpush2.msra.mxu0 0.0
    %371 = vmatprep.subr.mxu0 0.0
    %372 = vmatpush2.msra.mxu0 0.0
    %373 = vmatprep.subr.mxu0 0.0
    %374 = vmatpush2.msra.mxu0 0.0
    %375 = vmatprep.subr.mxu0 0.0
    %376 = vmatpush2.msra.mxu0 0.0
    %377 = vmatprep.subr.mxu0 0.0
    %378 = vmatpush2.msra.mxu0 0.0
    %379 = vmatprep.subr.mxu0 0.0
    %380 = vmatpush2.msra.mxu0 0.0
    %381 = vmatprep.subr.mxu0 0.0
    %382 = vmatpush2.msra.mxu0 0.0
    %383 = vmatprep.subr.mxu0 0.0
    %384 = vmatpush2.msra.mxu0 0.0
    %385 = vmatprep.subr.mxu0 0.0
    %386 = vmatpush2.msra.mxu0 0.0
    %387 = vmatprep.subr.mxu0 0.0
    %388 = vmatpush2.msra.mxu0 0.0
    %389 = vmatprep.subr.mxu0 0.0
    %390 = vmatpush2.msra.mxu0 0.0
    %391 = vmatprep.subr.mxu0 0.0
    %392 = vmatpush2.msra.mxu0 0.0
    %393 = vmatprep.subr.mxu0 0.0
    %394 = vmatpush2.msra.mxu0 0.0
    %395 = vmatprep.mubr.f32.mxu0 0.0
    %396 = vmatmul.mubr.f32.gmra.mxu0 %v329
    %v397 = vpop.f32.mrf.mxu0
    %v398 = vadd.f32 0.0, %v397
    %v399 = vpop.f32.mrf.mxu0
    %400 = vdwg.mxu0
    %v401 = vadd.f32 %v328, %v398
    %v402 = vxor.u32 %v401, 2147483648
    %v403 = vmul.f32 %v402, 1.442695
    %v404 = vpow.pop %v403
    %v405 = vadd.f32 %v404, 1.0
    %v406 = vrcp.pop %v405
    %v407 = vmul.f32 1.0, %v406
    %v408 = vtanh.pop %v401
    %v409 = vmul.f32 %v407, %v316
    %411 = vrot.lane.b32.xlu0 %v408, 32
    %v412 = vpop.permute.xlu0 %411
    %v414 = vmul.f32 %v407, %v412
    %416 = vrot.lane.b32.xlu0 %v414, 32
    %v417 = vpop.permute.xlu0 %416
    %v419 = vadd.f32 %v409, %v417
    %v420 = vtanh.pop %v419
    %422 = vrot.lane.b32.xlu0 %v420, 32
    %v423 = vpop.permute.xlu0 %422
    %v425 = vmul.f32 %v407, %v423
    %427 = vrot.lane.b32.xlu0 %v425, 64
    %v428 = vpop.permute.xlu0 %427
    %430 = vst.msk [vmem:[#allocation2 + $0x8] sm:$0xff] %vm224, %v428
    %v431 = vld [vmem:[#allocation3 + $0x10] sm:$0xff]
    %v432 = vsel %vm224, %v428, 0
    %434 = vmatprep.subr.mxu0 0.0
    %435 = vmatpush1.msra.mxu0 0.0
    %436 = vmatprep.subr.mxu0 0.0
    %437 = vmatpush1.msra.mxu0 0.0
    %438 = vmatprep.subr.mxu0 0.0
    %439 = vmatpush1.msra.mxu0 0.0
    %440 = vmatprep.subr.mxu0 0.0
    %441 = vmatpush1.msra.mxu0 0.0
    %442 = vmatprep.subr.mxu0 0.0
    %443 = vmatpush1.msra.mxu0 0.0
    %444 = vmatprep.subr.mxu0 0.0
    %445 = vmatpush1.msra.mxu0 0.0
    %446 = vmatprep.subr.mxu0 0.0
    %447 = vmatpush1.msra.mxu0 0.0
    %448 = vmatprep.subr.mxu0 0.0
    %449 = vmatpush1.msra.mxu0 0.0
    %450 = vmatprep.subr.mxu0 0.0
    %451 = vmatpush1.msra.mxu0 0.0
    %452 = vmatprep.subr.mxu0 0.0
    %453 = vmatpush1.msra.mxu0 0.0
    %454 = vmatprep.subr.mxu0 0.0
    %455 = vmatpush1.msra.mxu0 0.0
    %456 = vmatprep.subr.mxu0 0.0
    %457 = vmatpush1.msra.mxu0 0.0
    %458 = vmatprep.subr.mxu0 0.0
    %459 = vmatpush1.msra.mxu0 %v222
    %460 = vmatprep.subr.mxu0 0.0
    %461 = vmatpush1.msra.mxu0 %v221
    %462 = vmatprep.subr.mxu0 0.0
    %463 = vmatpush1.msra.mxu0 %v220
    %464 = vmatprep.subr.mxu0 0.0
    %465 = vmatpush1.msra.mxu0 %v219
    %466 = vmatprep.subr.mxu0 0.0
    %467 = vmatpush2.msra.mxu0 0.0
    %468 = vmatprep.subr.mxu0 0.0
    %469 = vmatpush2.msra.mxu0 0.0
    %470 = vmatprep.subr.mxu0 0.0
    %471 = vmatpush2.msra.mxu0 0.0
    %472 = vmatprep.subr.mxu0 0.0
    %473 = vmatpush2.msra.mxu0 0.0
    %474 = vmatprep.subr.mxu0 0.0
    %475 = vmatpush2.msra.mxu0 0.0
    %476 = vmatprep.subr.mxu0 0.0
    %477 = vmatpush2.msra.mxu0 0.0
    %478 = vmatprep.subr.mxu0 0.0
    %479 = vmatpush2.msra.mxu0 0.0
    %480 = vmatprep.subr.mxu0 0.0
    %481 = vmatpush2.msra.mxu0 0.0
    %482 = vmatprep.subr.mxu0 0.0
    %483 = vmatpush2.msra.mxu0 0.0
    %484 = vmatprep.subr.mxu0 0.0
    %485 = vmatpush2.msra.mxu0 0.0
    %486 = vmatprep.subr.mxu0 0.0
    %487 = vmatpush2.msra.mxu0 0.0
    %488 = vmatprep.subr.mxu0 0.0
    %489 = vmatpush2.msra.mxu0 0.0
    %490 = vmatprep.subr.mxu0 0.0
    %491 = vmatpush2.msra.mxu0 0.0
    %492 = vmatprep.subr.mxu0 0.0
    %493 = vmatpush2.msra.mxu0 0.0
    %494 = vmatprep.subr.mxu0 0.0
    %495 = vmatpush2.msra.mxu0 0.0
    %496 = vmatprep.subr.mxu0 0.0
    %497 = vmatpush2.msra.mxu0 0.0
    %498 = vmatprep.mubr.f32.mxu0 0.0
    %499 = vmatmul.mubr.f32.gmra.mxu0 %v432
    %v500 = vpop.f32.mrf.mxu0
    %v501 = vadd.f32 0.0, %v500
    %v502 = vpop.f32.mrf.mxu0
    %503 = vdwg.mxu0
    %v504 = vadd.f32 %v431, %v501
    %v505 = vxor.u32 %v504, 2147483648
    %v506 = vmul.f32 %v505, 1.442695
    %v507 = vpow.pop %v506
    %v508 = vadd.f32 %v507, 1.0
    %v509 = vrcp.pop %v508
    %v510 = vmul.f32 1.0, %v509
    %v511 = vtanh.pop %v504
    %v512 = vmul.f32 %v510, %v419
    %514 = vrot.lane.b32.xlu0 %v511, 32
    %v515 = vpop.permute.xlu0 %514
    %v517 = vmul.f32 %v510, %v515
    %519 = vrot.lane.b32.xlu0 %v517, 32
    %v520 = vpop.permute.xlu0 %519
    %v522 = vadd.f32 %v512, %v520
    %v523 = vtanh.pop %v522
    %525 = vrot.lane.b32.xlu0 %v523, 32
    %v526 = vpop.permute.xlu0 %525
    %v528 = vmul.f32 %v510, %v526
    %530 = vrot.lane.b32.xlu0 %v528, 64
    %v531 = vpop.permute.xlu0 %530
    %533 = vst.msk [vmem:[#allocation2 + $0x10] sm:$0xff] %vm224, %v531
    %v534 = vld [vmem:[#allocation3 + $0x18] sm:$0xff]
    %v535 = vsel %vm224, %v531, 0
    %537 = vmatprep.subr.mxu0 0.0
    %538 = vmatpush1.msra.mxu0 0.0
    %539 = vmatprep.subr.mxu0 0.0
    %540 = vmatpush1.msra.mxu0 0.0
    %541 = vmatprep.subr.mxu0 0.0
    %542 = vmatpush1.msra.mxu0 0.0
    %543 = vmatprep.subr.mxu0 0.0
    %544 = vmatpush1.msra.mxu0 0.0
    %545 = vmatprep.subr.mxu0 0.0
    %546 = vmatpush1.msra.mxu0 0.0
    %547 = vmatprep.subr.mxu0 0.0
    %548 = vmatpush1.msra.mxu0 0.0
    %549 = vmatprep.subr.mxu0 0.0
    %550 = vmatpush1.msra.mxu0 0.0
    %551 = vmatprep.subr.mxu0 0.0
    %552 = vmatpush1.msra.mxu0 0.0
    %553 = vmatprep.subr.mxu0 0.0
    %554 = vmatpush1.msra.mxu0 0.0
    %555 = vmatprep.subr.mxu0 0.0
    %556 = vmatpush1.msra.mxu0 0.0
    %557 = vmatprep.subr.mxu0 0.0
    %558 = vmatpush1.msra.mxu0 0.0
    %559 = vmatprep.subr.mxu0 0.0
    %560 = vmatpush1.msra.mxu0 0.0
    %561 = vmatprep.subr.mxu0 0.0
    %562 = vmatpush1.msra.mxu0 %v222
    %563 = vmatprep.subr.mxu0 0.0
    %564 = vmatpush1.msra.mxu0 %v221
    %565 = vmatprep.subr.mxu0 0.0
    %566 = vmatpush1.msra.mxu0 %v220
    %567 = vmatprep.subr.mxu0 0.0
    %568 = vmatpush1.msra.mxu0 %v219
    %569 = vmatprep.subr.mxu0 0.0
    %570 = vmatpush2.msra.mxu0 0.0
    %571 = vmatprep.subr.mxu0 0.0
    %572 = vmatpush2.msra.mxu0 0.0
    %573 = vmatprep.subr.mxu0 0.0
    %574 = vmatpush2.msra.mxu0 0.0
    %575 = vmatprep.subr.mxu0 0.0
    %576 = vmatpush2.msra.mxu0 0.0
    %577 = vmatprep.subr.mxu0 0.0
    %578 = vmatpush2.msra.mxu0 0.0
    %579 = vmatprep.subr.mxu0 0.0
    %580 = vmatpush2.msra.mxu0 0.0
    %581 = vmatprep.subr.mxu0 0.0
    %582 = vmatpush2.msra.mxu0 0.0
    %583 = vmatprep.subr.mxu0 0.0
    %584 = vmatpush2.msra.mxu0 0.0
    %585 = vmatprep.subr.mxu0 0.0
    %586 = vmatpush2.msra.mxu0 0.0
    %587 = vmatprep.subr.mxu0 0.0
    %588 = vmatpush2.msra.mxu0 0.0
    %589 = vmatprep.subr.mxu0 0.0
    %590 = vmatpush2.msra.mxu0 0.0
    %591 = vmatprep.subr.mxu0 0.0
    %592 = vmatpush2.msra.mxu0 0.0
    %593 = vmatprep.subr.mxu0 0.0
    %594 = vmatpush2.msra.mxu0 0.0
    %595 = vmatprep.subr.mxu0 0.0
    %596 = vmatpush2.msra.mxu0 0.0
    %597 = vmatprep.subr.mxu0 0.0
    %598 = vmatpush2.msra.mxu0 0.0
    %599 = vmatprep.subr.mxu0 0.0
    %600 = vmatpush2.msra.mxu0 0.0
    %601 = vmatprep.mubr.f32.mxu0 0.0
    %602 = vmatmul.mubr.f32.gmra.mxu0 %v535
    %v603 = vpop.f32.mrf.mxu0
    %v604 = vadd.f32 0.0, %v603
    %v605 = vpop.f32.mrf.mxu0
    %606 = vdwg.mxu0
    %v607 = vadd.f32 %v534, %v604
    %v608 = vxor.u32 %v607, 2147483648
    %v609 = vmul.f32 %v608, 1.442695
    %v610 = vpow.pop %v609
    %v611 = vadd.f32 %v610, 1.0
    %v612 = vrcp.pop %v611
    %v613 = vmul.f32 1.0, %v612
    %v614 = vtanh.pop %v607
    %v615 = vmul.f32 %v613, %v522
    %617 = vrot.lane.b32.xlu0 %v614, 32
    %v618 = vpop.permute.xlu0 %617
    %v620 = vmul.f32 %v613, %v618
    %622 = vrot.lane.b32.xlu0 %v620, 32
    %v623 = vpop.permute.xlu0 %622
    %v625 = vadd.f32 %v615, %v623
    %v626 = vtanh.pop %v625
    %628 = vrot.lane.b32.xlu0 %v626, 32
    %v629 = vpop.permute.xlu0 %628
    %v631 = vmul.f32 %v613, %v629
    %633 = vrot.lane.b32.xlu0 %v631, 64
    %v634 = vpop.permute.xlu0 %633
    %636 = vst.msk [vmem:[#allocation2 + $0x18] sm:$0xff] %vm224, %v634
    %v637 = vld [vmem:[#allocation3 + $0x20] sm:$0xff]
    %v638 = vsel %vm224, %v634, 0
    %640 = vmatprep.subr.mxu0 0.0
    %641 = vmatpush1.msra.mxu0 0.0
    %642 = vmatprep.subr.mxu0 0.0
    %643 = vmatpush1.msra.mxu0 0.0
    %644 = vmatprep.subr.mxu0 0.0
    %645 = vmatpush1.msra.mxu0 0.0
    %646 = vmatprep.subr.mxu0 0.0
    %647 = vmatpush1.msra.mxu0 0.0
    %648 = vmatprep.subr.mxu0 0.0
    %649 = vmatpush1.msra.mxu0 0.0
    %650 = vmatprep.subr.mxu0 0.0
    %651 = vmatpush1.msra.mxu0 0.0
    %652 = vmatprep.subr.mxu0 0.0
    %653 = vmatpush1.msra.mxu0 0.0
    %654 = vmatprep.subr.mxu0 0.0
    %655 = vmatpush1.msra.mxu0 0.0
    %656 = vmatprep.subr.mxu0 0.0
    %657 = vmatpush1.msra.mxu0 0.0
    %658 = vmatprep.subr.mxu0 0.0
    %659 = vmatpush1.msra.mxu0 0.0
    %660 = vmatprep.subr.mxu0 0.0
    %661 = vmatpush1.msra.mxu0 0.0
    %662 = vmatprep.subr.mxu0 0.0
    %663 = vmatpush1.msra.mxu0 0.0
    %664 = vmatprep.subr.mxu0 0.0
    %665 = vmatpush1.msra.mxu0 %v222
    %666 = vmatprep.subr.mxu0 0.0
    %667 = vmatpush1.msra.mxu0 %v221
    %668 = vmatprep.subr.mxu0 0.0
    %669 = vmatpush1.msra.mxu0 %v220
    %670 = vmatprep.subr.mxu0 0.0
    %671 = vmatpush1.msra.mxu0 %v219
    %672 = vmatprep.subr.mxu0 0.0
    %673 = vmatpush2.msra.mxu0 0.0
    %674 = vmatprep.subr.mxu0 0.0
    %675 = vmatpush2.msra.mxu0 0.0
    %676 = vmatprep.subr.mxu0 0.0
    %677 = vmatpush2.msra.mxu0 0.0
    %678 = vmatprep.subr.mxu0 0.0
    %679 = vmatpush2.msra.mxu0 0.0
    %680 = vmatprep.subr.mxu0 0.0
    %681 = vmatpush2.msra.mxu0 0.0
    %682 = vmatprep.subr.mxu0 0.0
    %683 = vmatpush2.msra.mxu0 0.0
    %684 = vmatprep.subr.mxu0 0.0
    %685 = vmatpush2.msra.mxu0 0.0
    %686 = vmatprep.subr.mxu0 0.0
    %687 = vmatpush2.msra.mxu0 0.0
    %688 = vmatprep.subr.mxu0 0.0
    %689 = vmatpush2.msra.mxu0 0.0
    %690 = vmatprep.subr.mxu0 0.0
    %691 = vmatpush2.msra.mxu0 0.0
    %692 = vmatprep.subr.mxu0 0.0
    %693 = vmatpush2.msra.mxu0 0.0
    %694 = vmatprep.subr.mxu0 0.0
    %695 = vmatpush2.msra.mxu0 0.0
    %696 = vmatprep.subr.mxu0 0.0
    %697 = vmatpush2.msra.mxu0 0.0
    %698 = vmatprep.subr.mxu0 0.0
    %699 = vmatpush2.msra.mxu0 0.0
    %700 = vmatprep.subr.mxu0 0.0
    %701 = vmatpush2.msra.mxu0 0.0
    %702 = vmatprep.subr.mxu0 0.0
    %703 = vmatpush2.msra.mxu0 0.0
    %704 = vmatprep.mubr.f32.mxu0 0.0
    %705 = vmatmul.mubr.f32.gmra.mxu0 %v638
    %v706 = vpop.f32.mrf.mxu0
    %v707 = vadd.f32 0.0, %v706
    %v708 = vpop.f32.mrf.mxu0
    %709 = vdwg.mxu0
    %v710 = vadd.f32 %v637, %v707
    %v711 = vxor.u32 %v710, 2147483648
    %v712 = vmul.f32 %v711, 1.442695
    %v713 = vpow.pop %v712
    %v714 = vadd.f32 %v713, 1.0
    %v715 = vrcp.pop %v714
    %v716 = vmul.f32 1.0, %v715
    %v717 = vtanh.pop %v710
    %v718 = vmul.f32 %v716, %v625
    %720 = vrot.lane.b32.xlu0 %v717, 32
    %v721 = vpop.permute.xlu0 %720
    %v723 = vmul.f32 %v716, %v721
    %725 = vrot.lane.b32.xlu0 %v723, 32
    %v726 = vpop.permute.xlu0 %725
    %v728 = vadd.f32 %v718, %v726
    %v729 = vtanh.pop %v728
    %731 = vrot.lane.b32.xlu0 %v729, 32
    %v732 = vpop.permute.xlu0 %731
    %v734 = vmul.f32 %v716, %v732
    %736 = vrot.lane.b32.xlu0 %v734, 64
    %v737 = vpop.permute.xlu0 %736
    %739 = vst.msk [vmem:[#allocation2 + $0x20] sm:$0xff] %vm224, %v737
    %v740 = vld [vmem:[#allocation3 + $0x28] sm:$0xff]
    %v741 = vsel %vm224, %v737, 0
    %743 = vmatprep.subr.mxu0 0.0
    %744 = vmatpush1.msra.mxu0 0.0
    %745 = vmatprep.subr.mxu0 0.0
    %746 = vmatpush1.msra.mxu0 0.0
    %747 = vmatprep.subr.mxu0 0.0
    %748 = vmatpush1.msra.mxu0 0.0
    %749 = vmatprep.subr.mxu0 0.0
    %750 = vmatpush1.msra.mxu0 0.0
    %751 = vmatprep.subr.mxu0 0.0
    %752 = vmatpush1.msra.mxu0 0.0
    %753 = vmatprep.subr.mxu0 0.0
    %754 = vmatpush1.msra.mxu0 0.0
    %755 = vmatprep.subr.mxu0 0.0
    %756 = vmatpush1.msra.mxu0 0.0
    %757 = vmatprep.subr.mxu0 0.0
    %758 = vmatpush1.msra.mxu0 0.0
    %759 = vmatprep.subr.mxu0 0.0
    %760 = vmatpush1.msra.mxu0 0.0
    %761 = vmatprep.subr.mxu0 0.0
    %762 = vmatpush1.msra.mxu0 0.0
    %763 = vmatprep.subr.mxu0 0.0
    %764 = vmatpush1.msra.mxu0 0.0
    %765 = vmatprep.subr.mxu0 0.0
    %766 = vmatpush1.msra.mxu0 0.0
    %767 = vmatprep.subr.mxu0 0.0
    %768 = vmatpush1.msra.mxu0 %v222
    %769 = vmatprep.subr.mxu0 0.0
    %770 = vmatpush1.msra.mxu0 %v221
    %771 = vmatprep.subr.mxu0 0.0
    %772 = vmatpush1.msra.mxu0 %v220
    %773 = vmatprep.subr.mxu0 0.0
    %774 = vmatpush1.msra.mxu0 %v219
    %775 = vmatprep.subr.mxu0 0.0
    %776 = vmatpush2.msra.mxu0 0.0
    %777 = vmatprep.subr.mxu0 0.0
    %778 = vmatpush2.msra.mxu0 0.0
    %779 = vmatprep.subr.mxu0 0.0
    %780 = vmatpush2.msra.mxu0 0.0
    %781 = vmatprep.subr.mxu0 0.0
    %782 = vmatpush2.msra.mxu0 0.0
    %783 = vmatprep.subr.mxu0 0.0
    %784 = vmatpush2.msra.mxu0 0.0
    %785 = vmatprep.subr.mxu0 0.0
    %786 = vmatpush2.msra.mxu0 0.0
    %787 = vmatprep.subr.mxu0 0.0
    %788 = vmatpush2.msra.mxu0 0.0
    %789 = vmatprep.subr.mxu0 0.0
    %790 = vmatpush2.msra.mxu0 0.0
    %791 = vmatprep.subr.mxu0 0.0
    %792 = vmatpush2.msra.mxu0 0.0
    %793 = vmatprep.subr.mxu0 0.0
    %794 = vmatpush2.msra.mxu0 0.0
    %795 = vmatprep.subr.mxu0 0.0
    %796 = vmatpush2.msra.mxu0 0.0
    %797 = vmatprep.subr.mxu0 0.0
    %798 = vmatpush2.msra.mxu0 0.0
    %799 = vmatprep.subr.mxu0 0.0
    %800 = vmatpush2.msra.mxu0 0.0
    %801 = vmatprep.subr.mxu0 0.0
    %802 = vmatpush2.msra.mxu0 0.0
    %803 = vmatprep.subr.mxu0 0.0
    %804 = vmatpush2.msra.mxu0 0.0
    %805 = vmatprep.subr.mxu0 0.0
    %806 = vmatpush2.msra.mxu0 0.0
    %807 = vmatprep.mubr.f32.mxu0 0.0
    %808 = vmatmul.mubr.f32.gmra.mxu0 %v741
    %v809 = vpop.f32.mrf.mxu0
    %v810 = vadd.f32 0.0, %v809
    %v811 = vpop.f32.mrf.mxu0
    %812 = vdwg.mxu0
    %v813 = vadd.f32 %v740, %v810
    %v814 = vxor.u32 %v813, 2147483648
    %v815 = vmul.f32 %v814, 1.442695
    %v816 = vpow.pop %v815
    %v817 = vadd.f32 %v816, 1.0
    %v818 = vrcp.pop %v817
    %v819 = vmul.f32 1.0, %v818
    %v820 = vtanh.pop %v813
    %v821 = vmul.f32 %v819, %v728
    %823 = vrot.lane.b32.xlu0 %v820, 32
    %v824 = vpop.permute.xlu0 %823
    %v826 = vmul.f32 %v819, %v824
    %828 = vrot.lane.b32.xlu0 %v826, 32
    %v829 = vpop.permute.xlu0 %828
    %v831 = vadd.f32 %v821, %v829
    %v832 = vtanh.pop %v831
    %834 = vrot.lane.b32.xlu0 %v832, 32
    %v835 = vpop.permute.xlu0 %834
    %v837 = vmul.f32 %v819, %v835
    %839 = vrot.lane.b32.xlu0 %v837, 64
    %v840 = vpop.permute.xlu0 %839
    %842 = vst.msk [vmem:[#allocation2 + $0x28] sm:$0xff] %vm224, %v840
    %v843 = vld [vmem:[#allocation3 + $0x30] sm:$0xff]
    %v844 = vsel %vm224, %v840, 0
    %846 = vmatprep.subr.mxu0 0.0
    %847 = vmatpush1.msra.mxu0 0.0
    %848 = vmatprep.subr.mxu0 0.0
    %849 = vmatpush1.msra.mxu0 0.0
    %850 = vmatprep.subr.mxu0 0.0
    %851 = vmatpush1.msra.mxu0 0.0
    %852 = vmatprep.subr.mxu0 0.0
    %853 = vmatpush1.msra.mxu0 0.0
    %854 = vmatprep.subr.mxu0 0.0
    %855 = vmatpush1.msra.mxu0 0.0
    %856 = vmatprep.subr.mxu0 0.0
    %857 = vmatpush1.msra.mxu0 0.0
    %858 = vmatprep.subr.mxu0 0.0
    %859 = vmatpush1.msra.mxu0 0.0
    %860 = vmatprep.subr.mxu0 0.0
    %861 = vmatpush1.msra.mxu0 0.0
    %862 = vmatprep.subr.mxu0 0.0
    %863 = vmatpush1.msra.mxu0 0.0
    %864 = vmatprep.subr.mxu0 0.0
    %865 = vmatpush1.msra.mxu0 0.0
    %866 = vmatprep.subr.mxu0 0.0
    %867 = vmatpush1.msra.mxu0 0.0
    %868 = vmatprep.subr.mxu0 0.0
    %869 = vmatpush1.msra.mxu0 0.0
    %870 = vmatprep.subr.mxu0 0.0
    %871 = vmatpush1.msra.mxu0 %v222
    %872 = vmatprep.subr.mxu0 0.0
    %873 = vmatpush1.msra.mxu0 %v221
    %874 = vmatprep.subr.mxu0 0.0
    %875 = vmatpush1.msra.mxu0 %v220
    %876 = vmatprep.subr.mxu0 0.0
    %877 = vmatpush1.msra.mxu0 %v219
    %878 = vmatprep.subr.mxu0 0.0
    %879 = vmatpush2.msra.mxu0 0.0
    %880 = vmatprep.subr.mxu0 0.0
    %881 = vmatpush2.msra.mxu0 0.0
    %882 = vmatprep.subr.mxu0 0.0
    %883 = vmatpush2.msra.mxu0 0.0
    %884 = vmatprep.subr.mxu0 0.0
    %885 = vmatpush2.msra.mxu0 0.0
    %886 = vmatprep.subr.mxu0 0.0
    %887 = vmatpush2.msra.mxu0 0.0
    %888 = vmatprep.subr.mxu0 0.0
    %889 = vmatpush2.msra.mxu0 0.0
    %890 = vmatprep.subr.mxu0 0.0
    %891 = vmatpush2.msra.mxu0 0.0
    %892 = vmatprep.subr.mxu0 0.0
    %893 = vmatpush2.msra.mxu0 0.0
    %894 = vmatprep.subr.mxu0 0.0
    %895 = vmatpush2.msra.mxu0 0.0
    %896 = vmatprep.subr.mxu0 0.0
    %897 = vmatpush2.msra.mxu0 0.0
    %898 = vmatprep.subr.mxu0 0.0
    %899 = vmatpush2.msra.mxu0 0.0
    %900 = vmatprep.subr.mxu0 0.0
    %901 = vmatpush2.msra.mxu0 0.0
    %902 = vmatprep.subr.mxu0 0.0
    %903 = vmatpush2.msra.mxu0 0.0
    %904 = vmatprep.subr.mxu0 0.0
    %905 = vmatpush2.msra.mxu0 0.0
    %906 = vmatprep.subr.mxu0 0.0
    %907 = vmatpush2.msra.mxu0 0.0
    %908 = vmatprep.subr.mxu0 0.0
    %909 = vmatpush2.msra.mxu0 0.0
    %910 = vmatprep.mubr.f32.mxu0 0.0
    %911 = vmatmul.mubr.f32.gmra.mxu0 %v844
    %v912 = vpop.f32.mrf.mxu0
    %v913 = vadd.f32 0.0, %v912
    %v914 = vpop.f32.mrf.mxu0
    %915 = vdwg.mxu0
    %v916 = vadd.f32 %v843, %v913
    %v917 = vxor.u32 %v916, 2147483648
    %v918 = vmul.f32 %v917, 1.442695
    %v919 = vpow.pop %v918
    %v920 = vadd.f32 %v919, 1.0
    %v921 = vrcp.pop %v920
    %v922 = vmul.f32 1.0, %v921
    %v923 = vtanh.pop %v916
    %v924 = vmul.f32 %v922, %v831
    %926 = vrot.lane.b32.xlu0 %v923, 32
    %v927 = vpop.permute.xlu0 %926
    %v929 = vmul.f32 %v922, %v927
    %931 = vrot.lane.b32.xlu0 %v929, 32
    %v932 = vpop.permute.xlu0 %931
    %v934 = vadd.f32 %v924, %v932
    %v935 = vtanh.pop %v934
    %937 = vrot.lane.b32.xlu0 %v935, 32
    %v938 = vpop.permute.xlu0 %937
    %v940 = vmul.f32 %v922, %v938
    %942 = vrot.lane.b32.xlu0 %v940, 64
    %v943 = vpop.permute.xlu0 %942
    %945 = vst.msk [vmem:[#allocation2 + $0x30] sm:$0xff] %vm224, %v943
    %v946 = vld [vmem:[#allocation3 + $0x38] sm:$0xff]
    %v947 = vsel %vm224, %v943, 0
    %949 = vmatprep.subr.mxu0 0.0
    %950 = vmatpush1.msra.mxu0 0.0
    %951 = vmatprep.subr.mxu0 0.0
    %952 = vmatpush1.msra.mxu0 0.0
    %953 = vmatprep.subr.mxu0 0.0
    %954 = vmatpush1.msra.mxu0 0.0
    %955 = vmatprep.subr.mxu0 0.0
    %956 = vmatpush1.msra.mxu0 0.0
    %957 = vmatprep.subr.mxu0 0.0
    %958 = vmatpush1.msra.mxu0 0.0
    %959 = vmatprep.subr.mxu0 0.0
    %960 = vmatpush1.msra.mxu0 0.0
    %961 = vmatprep.subr.mxu0 0.0
    %962 = vmatpush1.msra.mxu0 0.0
    %963 = vmatprep.subr.mxu0 0.0
    %964 = vmatpush1.msra.mxu0 0.0
    %965 = vmatprep.subr.mxu0 0.0
    %966 = vmatpush1.msra.mxu0 0.0
    %967 = vmatprep.subr.mxu0 0.0
    %968 = vmatpush1.msra.mxu0 0.0
    %969 = vmatprep.subr.mxu0 0.0
    %970 = vmatpush1.msra.mxu0 0.0
    %971 = vmatprep.subr.mxu0 0.0
    %972 = vmatpush1.msra.mxu0 0.0
    %973 = vmatprep.subr.mxu0 0.0
    %974 = vmatpush1.msra.mxu0 %v222
    %975 = vmatprep.subr.mxu0 0.0
    %976 = vmatpush1.msra.mxu0 %v221
    %977 = vmatprep.subr.mxu0 0.0
    %978 = vmatpush1.msra.mxu0 %v220
    %979 = vmatprep.subr.mxu0 0.0
    %980 = vmatpush1.msra.mxu0 %v219
    %981 = vmatprep.subr.mxu0 0.0
    %982 = vmatpush2.msra.mxu0 0.0
    %983 = vmatprep.subr.mxu0 0.0
    %984 = vmatpush2.msra.mxu0 0.0
    %985 = vmatprep.subr.mxu0 0.0
    %986 = vmatpush2.msra.mxu0 0.0
    %987 = vmatprep.subr.mxu0 0.0
    %988 = vmatpush2.msra.mxu0 0.0
    %989 = vmatprep.subr.mxu0 0.0
    %990 = vmatpush2.msra.mxu0 0.0
    %991 = vmatprep.subr.mxu0 0.0
    %992 = vmatpush2.msra.mxu0 0.0
    %993 = vmatprep.subr.mxu0 0.0
    %994 = vmatpush2.msra.mxu0 0.0
    %995 = vmatprep.subr.mxu0 0.0
    %996 = vmatpush2.msra.mxu0 0.0
    %997 = vmatprep.subr.mxu0 0.0
    %998 = vmatpush2.msra.mxu0 0.0
    %999 = vmatprep.subr.mxu0 0.0
    %1000 = vmatpush2.msra.mxu0 0.0
    %1001 = vmatprep.subr.mxu0 0.0
    %1002 = vmatpush2.msra.mxu0 0.0
    %1003 = vmatprep.subr.mxu0 0.0
    %1004 = vmatpush2.msra.mxu0 0.0
    %1005 = vmatprep.subr.mxu0 0.0
    %1006 = vmatpush2.msra.mxu0 0.0
    %1007 = vmatprep.subr.mxu0 0.0
    %1008 = vmatpush2.msra.mxu0 0.0
    %1009 = vmatprep.subr.mxu0 0.0
    %1010 = vmatpush2.msra.mxu0 0.0
    %1011 = vmatprep.subr.mxu0 0.0
    %1012 = vmatpush2.msra.mxu0 0.0
    %1013 = vmatprep.mubr.f32.mxu0 0.0
    %1014 = vmatmul.mubr.f32.gmra.mxu0 %v947
    %v1015 = vpop.f32.mrf.mxu0
    %v1016 = vadd.f32 0.0, %v1015
    %v1017 = vpop.f32.mrf.mxu0
    %1018 = vdwg.mxu0
    %v1019 = vadd.f32 %v946, %v1016
    %v1020 = vxor.u32 %v1019, 2147483648
    %v1021 = vmul.f32 %v1020, 1.442695
    %v1022 = vpow.pop %v1021
    %v1023 = vadd.f32 %v1022, 1.0
    %v1024 = vrcp.pop %v1023
    %v1025 = vmul.f32 1.0, %v1024
    %v1026 = vtanh.pop %v1019
    %v1027 = vmul.f32 %v1025, %v934
    %1029 = vrot.lane.b32.xlu0 %v1026, 32
    %v1030 = vpop.permute.xlu0 %1029
    %v1032 = vmul.f32 %v1025, %v1030
    %1034 = vrot.lane.b32.xlu0 %v1032, 32
    %v1035 = vpop.permute.xlu0 %1034
    %v1037 = vadd.f32 %v1027, %v1035
    %v1038 = vtanh.pop %v1037
    %1040 = vrot.lane.b32.xlu0 %v1038, 32
    %v1041 = vpop.permute.xlu0 %1040
    %v1043 = vmul.f32 %v1025, %v1041
    %1045 = vrot.lane.b32.xlu0 %v1043, 64
    %v1046 = vpop.permute.xlu0 %1045
    %1048 = vst.msk [vmem:[#allocation2 + $0x38] sm:$0xff] %vm224, %v1046
    %v1049 = vld [vmem:[#allocation2] sm:$0xff]
    %v1050 = vld [vmem:[#allocation2 + $0x8] sm:$0xff]
    %v1051 = vld [vmem:[#allocation2 + $0x10] sm:$0xff]
    %v1052 = vld [vmem:[#allocation2 + $0x18] sm:$0xff]
    %v1053 = vld [vmem:[#allocation2 + $0x20] sm:$0xff]
    %v1054 = vld [vmem:[#allocation2 + $0x28] sm:$0xff]
    %v1055 = vld [vmem:[#allocation2 + $0x30] sm:$0xff]
    %v1056 = vld [vmem:[#allocation2 + $0x38] sm:$0xff]
    %v1057 = vld [vmem:[%s4] sm:$0xff]
    %v1058 = vld [vmem:[%s4 + $0x8] sm:$0xff]
    %v1059 = vld [vmem:[%s4 + $0x10] sm:$0xff]
    %v1060 = vld [vmem:[%s4 + $0x18] sm:$0xff]
    %v1061 = vld [vmem:[%s6] sm:$0x1]
    %v1063 = vlaneseq
    %v1064 = vshrl.u32 %v1063, 7
    %v1065 = vsub.s32 0, %v1064
    %v1066 = vrot.slane %v1061, %v1065
    %v1069 = vsel %vm224, %v1049, 0
    %v1072 = vsel %vm224, %v1050, 0
    %v1075 = vsel %vm224, %v1051, 0
    %v1078 = vsel %vm224, %v1052, 0
    %v1081 = vsel %vm224, %v1053, 0
    %v1084 = vsel %vm224, %v1054, 0
    %v1087 = vsel %vm224, %v1055, 0
    %v1090 = vsel %vm224, %v1056, 0
    %1092 = vmatprep.subr.mxu0 0.0
    %1093 = vmatpush1.msra.mxu0 0.0
    %1094 = vmatprep.subr.mxu0 0.0
    %1095 = vmatpush1.msra.mxu0 0.0
    %1096 = vmatprep.subr.mxu0 0.0
    %1097 = vmatpush1.msra.mxu0 0.0
    %1098 = vmatprep.subr.mxu0 0.0
    %1099 = vmatpush1.msra.mxu0 0.0
    %1100 = vmatprep.subr.mxu0 0.0
    %1101 = vmatpush1.msra.mxu0 0.0
    %1102 = vmatprep.subr.mxu0 0.0
    %1103 = vmatpush1.msra.mxu0 0.0
    %1104 = vmatprep.subr.mxu0 0.0
    %1105 = vmatpush1.msra.mxu0 0.0
    %1106 = vmatprep.subr.mxu0 0.0
    %1107 = vmatpush1.msra.mxu0 0.0
    %1108 = vmatprep.subr.mxu0 0.0
    %1109 = vmatpush1.msra.mxu0 0.0
    %1110 = vmatprep.subr.mxu0 0.0
    %1111 = vmatpush1.msra.mxu0 0.0
    %1112 = vmatprep.subr.mxu0 0.0
    %1113 = vmatpush1.msra.mxu0 0.0
    %1114 = vmatprep.subr.mxu0 0.0
    %1115 = vmatpush1.msra.mxu0 0.0
    %1116 = vmatprep.subr.mxu0 0.0
    %1117 = vmatpush1.msra.mxu0 %v1060
    %1118 = vmatprep.subr.mxu0 0.0
    %1119 = vmatpush1.msra.mxu0 %v1059
    %1120 = vmatprep.subr.mxu0 0.0
    %1121 = vmatpush1.msra.mxu0 %v1058
    %1122 = vmatprep.subr.mxu0 0.0
    %1123 = vmatpush1.msra.mxu0 %v1057
    %1124 = vmatprep.subr.mxu0 0.0
    %1125 = vmatpush2.msra.mxu0 0.0
    %1126 = vmatprep.subr.mxu0 0.0
    %1127 = vmatpush2.msra.mxu0 0.0
    %1128 = vmatprep.subr.mxu0 0.0
    %1129 = vmatpush2.msra.mxu0 0.0
    %1130 = vmatprep.subr.mxu0 0.0
    %1131 = vmatpush2.msra.mxu0 0.0
    %1132 = vmatprep.subr.mxu0 0.0
    %1133 = vmatpush2.msra.mxu0 0.0
    %1134 = vmatprep.subr.mxu0 0.0
    %1135 = vmatpush2.msra.mxu0 0.0
    %1136 = vmatprep.subr.mxu0 0.0
    %1137 = vmatpush2.msra.mxu0 0.0
    %1138 = vmatprep.subr.mxu0 0.0
    %1139 = vmatpush2.msra.mxu0 0.0
    %1140 = vmatprep.subr.mxu0 0.0
    %1141 = vmatpush2.msra.mxu0 0.0
    %1142 = vmatprep.subr.mxu0 0.0
    %1143 = vmatpush2.msra.mxu0 0.0
    %1144 = vmatprep.subr.mxu0 0.0
    %1145 = vmatpush2.msra.mxu0 0.0
    %1146 = vmatprep.subr.mxu0 0.0
    %1147 = vmatpush2.msra.mxu0 0.0
    %1148 = vmatprep.subr.mxu0 0.0
    %1149 = vmatpush2.msra.mxu0 0.0
    %1150 = vmatprep.subr.mxu0 0.0
    %1151 = vmatpush2.msra.mxu0 0.0
    %1152 = vmatprep.subr.mxu0 0.0
    %1153 = vmatpush2.msra.mxu0 0.0
    %1154 = vmatprep.subr.mxu0 0.0
    %1155 = vmatpush2.msra.mxu0 0.0
    %1156 = vmatprep.mubr.f32.mxu0 0.0
    %1157 = vmatmul.mubr.f32.gmra.mxu0 %v1069
    %v1158 = vpop.f32.mrf.mxu0
    %v1159 = vadd.f32 %v1066, %v1158
    %v1160 = vpop.f32.mrf.mxu0
    %1161 = vmatprep.mubr.f32.mxu0 0.0
    %1162 = vmatmul.mubr.f32.gmra.mxu0 %v1072
    %v1163 = vpop.f32.mrf.mxu0
    %v1164 = vadd.f32 %v1066, %v1163
    %v1165 = vpop.f32.mrf.mxu0
    %1166 = vmatprep.mubr.f32.mxu0 0.0
    %1167 = vmatmul.mubr.f32.gmra.mxu0 %v1075
    %v1168 = vpop.f32.mrf.mxu0
    %v1169 = vadd.f32 %v1066, %v1168
    %v1170 = vpop.f32.mrf.mxu0
    %1171 = vmatprep.mubr.f32.mxu0 0.0
    %1172 = vmatmul.mubr.f32.gmra.mxu0 %v1078
    %v1173 = vpop.f32.mrf.mxu0
    %v1174 = vadd.f32 %v1066, %v1173
    %v1175 = vpop.f32.mrf.mxu0
    %1176 = vmatprep.mubr.f32.mxu0 0.0
    %1177 = vmatmul.mubr.f32.gmra.mxu0 %v1081
    %v1178 = vpop.f32.mrf.mxu0
    %v1179 = vadd.f32 %v1066, %v1178
    %v1180 = vpop.f32.mrf.mxu0
    %1181 = vmatprep.mubr.f32.mxu0 0.0
    %1182 = vmatmul.mubr.f32.gmra.mxu0 %v1084
    %v1183 = vpop.f32.mrf.mxu0
    %v1184 = vadd.f32 %v1066, %v1183
    %v1185 = vpop.f32.mrf.mxu0
    %1186 = vmatprep.mubr.f32.mxu0 0.0
    %1187 = vmatmul.mubr.f32.gmra.mxu0 %v1087
    %v1188 = vpop.f32.mrf.mxu0
    %v1189 = vadd.f32 %v1066, %v1188
    %v1190 = vpop.f32.mrf.mxu0
    %1191 = vmatprep.mubr.f32.mxu0 0.0
    %1192 = vmatmul.mubr.f32.gmra.mxu0 %v1090
    %v1193 = vpop.f32.mrf.mxu0
    %v1194 = vadd.f32 %v1066, %v1193
    %v1195 = vpop.f32.mrf.mxu0
    %1196 = vdwg.mxu0
    %1197 = vst [vmem:[#allocation3] sm:$0xff] %v1159
    %1198 = vst [vmem:[#allocation3 + $0x8] sm:$0xff] %v1164
    %1199 = vst [vmem:[#allocation3 + $0x10] sm:$0xff] %v1169
    %1200 = vst [vmem:[#allocation3 + $0x18] sm:$0xff] %v1174
    %1201 = vst [vmem:[#allocation3 + $0x20] sm:$0xff] %v1179
    %1202 = vst [vmem:[#allocation3 + $0x28] sm:$0xff] %v1184
    %1203 = vst [vmem:[#allocation3 + $0x30] sm:$0xff] %v1189
    %1204 = vst [vmem:[#allocation3 + $0x38] sm:$0xff] %v1194
    %v1205 = vld [vmem:[#allocation4] sm:$0xff]
    %v1206 = vld [vmem:[#allocation4 + $0x8] sm:$0xff]
    %v1207 = vld [vmem:[#allocation4 + $0x10] sm:$0xff]
    %v1208 = vld [vmem:[#allocation4 + $0x18] sm:$0xff]
    %v1209 = vld [vmem:[#allocation3] sm:$0xff]
    %1210 = vmatprep.subr.mxu0 0.0
    %1211 = vmatpush1.msra.mxu0 0.0
    %1212 = vmatprep.subr.mxu0 0.0
    %1213 = vmatpush1.msra.mxu0 0.0
    %1214 = vmatprep.subr.mxu0 0.0
    %1215 = vmatpush1.msra.mxu0 0.0
    %1216 = vmatprep.subr.mxu0 0.0
    %1217 = vmatpush1.msra.mxu0 0.0
    %1218 = vmatprep.subr.mxu0 0.0
    %1219 = vmatpush1.msra.mxu0 0.0
    %1220 = vmatprep.subr.mxu0 0.0
    %1221 = vmatpush1.msra.mxu0 0.0
    %1222 = vmatprep.subr.mxu0 0.0
    %1223 = vmatpush1.msra.mxu0 0.0
    %1224 = vmatprep.subr.mxu0 0.0
    %1225 = vmatpush1.msra.mxu0 0.0
    %1226 = vmatprep.subr.mxu0 0.0
    %1227 = vmatpush1.msra.mxu0 0.0
    %1228 = vmatprep.subr.mxu0 0.0
    %1229 = vmatpush1.msra.mxu0 0.0
    %1230 = vmatprep.subr.mxu0 0.0
    %1231 = vmatpush1.msra.mxu0 0.0
    %1232 = vmatprep.subr.mxu0 0.0
    %1233 = vmatpush1.msra.mxu0 0.0
    %1234 = vmatprep.subr.mxu0 0.0
    %1235 = vmatpush1.msra.mxu0 %v1208
    %1236 = vmatprep.subr.mxu0 0.0
    %1237 = vmatpush1.msra.mxu0 %v1207
    %1238 = vmatprep.subr.mxu0 0.0
    %1239 = vmatpush1.msra.mxu0 %v1206
    %1240 = vmatprep.subr.mxu0 0.0
    %1241 = vmatpush1.msra.mxu0 %v1205
    %1242 = vmatprep.subr.mxu0 0.0
    %1243 = vmatpush2.msra.mxu0 0.0
    %1244 = vmatprep.subr.mxu0 0.0
    %1245 = vmatpush2.msra.mxu0 0.0
    %1246 = vmatprep.subr.mxu0 0.0
    %1247 = vmatpush2.msra.mxu0 0.0
    %1248 = vmatprep.subr.mxu0 0.0
    %1249 = vmatpush2.msra.mxu0 0.0
    %1250 = vmatprep.subr.mxu0 0.0
    %1251 = vmatpush2.msra.mxu0 0.0
    %1252 = vmatprep.subr.mxu0 0.0
    %1253 = vmatpush2.msra.mxu0 0.0
    %1254 = vmatprep.subr.mxu0 0.0
    %1255 = vmatpush2.msra.mxu0 0.0
    %1256 = vmatprep.subr.mxu0 0.0
    %1257 = vmatpush2.msra.mxu0 0.0
    %1258 = vmatprep.subr.mxu0 0.0
    %1259 = vmatpush2.msra.mxu0 0.0
    %1260 = vmatprep.subr.mxu0 0.0
    %1261 = vmatpush2.msra.mxu0 0.0
    %1262 = vmatprep.subr.mxu0 0.0
    %1263 = vmatpush2.msra.mxu0 0.0
    %1264 = vmatprep.subr.mxu0 0.0
    %1265 = vmatpush2.msra.mxu0 0.0
    %1266 = vmatprep.subr.mxu0 0.0
    %1267 = vmatpush2.msra.mxu0 0.0
    %1268 = vmatprep.subr.mxu0 0.0
    %1269 = vmatpush2.msra.mxu0 0.0
    %1270 = vmatprep.subr.mxu0 0.0
    %1271 = vmatpush2.msra.mxu0 0.0
    %1272 = vmatprep.subr.mxu0 0.0
    %1273 = vmatpush2.msra.mxu0 0.0
    %1274 = vmatprep.mubr.f32.mxu0 0.0
    %1275 = vmatmul.mubr.f32.gmra.mxu0 %v226
    %v1276 = vpop.f32.mrf.mxu0
    %v1277 = vadd.f32 0.0, %v1276
    %v1278 = vpop.f32.mrf.mxu0
    %1279 = vdwg.mxu0
    %v1280 = vadd.f32 %v1209, %v1277
    %v1281 = vxor.u32 %v1280, 2147483648
    %v1282 = vmul.f32 %v1281, 1.442695
    %v1283 = vpow.pop %v1282
    %v1284 = vadd.f32 %v1283, 1.0
    %v1285 = vrcp.pop %v1284
    %v1286 = vmul.f32 1.0, %v1285
    %v1287 = vtanh.pop %v1280
    %v1288 = vmul.f32 %v1286, 0.0
    %1290 = vrot.lane.b32.xlu0 %v1287, 32
    %v1291 = vpop.permute.xlu0 %1290
    %v1293 = vmul.f32 %v1286, %v1291
    %1295 = vrot.lane.b32.xlu0 %v1293, 32
    %v1296 = vpop.permute.xlu0 %1295
    %v1298 = vadd.f32 %v1288, %v1296
    %v1299 = vtanh.pop %v1298
    %1301 = vrot.lane.b32.xlu0 %v1299, 32
    %v1302 = vpop.permute.xlu0 %1301
    %v1304 = vmul.f32 %v1286, %v1302
    %v1305 = vld [vmem:[#allocation3 + $0x8] sm:$0xff]
    %1307 = vrot.lane.b32.xlu0 %v1304, 64
    %v1308 = vpop.permute.xlu0 %1307
    %v1309 = vsel %vm224, %v1308, 0
    %1311 = vmatprep.subr.mxu0 0.0
    %1312 = vmatpush1.msra.mxu0 0.0
    %1313 = vmatprep.subr.mxu0 0.0
    %1314 = vmatpush1.msra.mxu0 0.0
    %1315 = vmatprep.subr.mxu0 0.0
    %1316 = vmatpush1.msra.mxu0 0.0
    %1317 = vmatprep.subr.mxu0 0.0
    %1318 = vmatpush1.msra.mxu0 0.0
    %1319 = vmatprep.subr.mxu0 0.0
    %1320 = vmatpush1.msra.mxu0 0.0
    %1321 = vmatprep.subr.mxu0 0.0
    %1322 = vmatpush1.msra.mxu0 0.0
    %1323 = vmatprep.subr.mxu0 0.0
    %1324 = vmatpush1.msra.mxu0 0.0
    %1325 = vmatprep.subr.mxu0 0.0
    %1326 = vmatpush1.msra.mxu0 0.0
    %1327 = vmatprep.subr.mxu0 0.0
    %1328 = vmatpush1.msra.mxu0 0.0
    %1329 = vmatprep.subr.mxu0 0.0
    %1330 = vmatpush1.msra.mxu0 0.0
    %1331 = vmatprep.subr.mxu0 0.0
    %1332 = vmatpush1.msra.mxu0 0.0
    %1333 = vmatprep.subr.mxu0 0.0
    %1334 = vmatpush1.msra.mxu0 0.0
    %1335 = vmatprep.subr.mxu0 0.0
    %1336 = vmatpush1.msra.mxu0 %v1208
    %1337 = vmatprep.subr.mxu0 0.0
    %1338 = vmatpush1.msra.mxu0 %v1207
    %1339 = vmatprep.subr.mxu0 0.0
    %1340 = vmatpush1.msra.mxu0 %v1206
    %1341 = vmatprep.subr.mxu0 0.0
    %1342 = vmatpush1.msra.mxu0 %v1205
    %1343 = vmatprep.subr.mxu0 0.0
    %1344 = vmatpush2.msra.mxu0 0.0
    %1345 = vmatprep.subr.mxu0 0.0
    %1346 = vmatpush2.msra.mxu0 0.0
    %1347 = vmatprep.subr.mxu0 0.0
    %1348 = vmatpush2.msra.mxu0 0.0
    %1349 = vmatprep.subr.mxu0 0.0
    %1350 = vmatpush2.msra.mxu0 0.0
    %1351 = vmatprep.subr.mxu0 0.0
    %1352 = vmatpush2.msra.mxu0 0.0
    %1353 = vmatprep.subr.mxu0 0.0
    %1354 = vmatpush2.msra.mxu0 0.0
    %1355 = vmatprep.subr.mxu0 0.0
    %1356 = vmatpush2.msra.mxu0 0.0
    %1357 = vmatprep.subr.mxu0 0.0
    %1358 = vmatpush2.msra.mxu0 0.0
    %1359 = vmatprep.subr.mxu0 0.0
    %1360 = vmatpush2.msra.mxu0 0.0
    %1361 = vmatprep.subr.mxu0 0.0
    %1362 = vmatpush2.msra.mxu0 0.0
    %1363 = vmatprep.subr.mxu0 0.0
    %1364 = vmatpush2.msra.mxu0 0.0
    %1365 = vmatprep.subr.mxu0 0.0
    %1366 = vmatpush2.msra.mxu0 0.0
    %1367 = vmatprep.subr.mxu0 0.0
    %1368 = vmatpush2.msra.mxu0 0.0
    %1369 = vmatprep.subr.mxu0 0.0
    %1370 = vmatpush2.msra.mxu0 0.0
    %1371 = vmatprep.subr.mxu0 0.0
    %1372 = vmatpush2.msra.mxu0 0.0
    %1373 = vmatprep.subr.mxu0 0.0
    %1374 = vmatpush2.msra.mxu0 0.0
    %1375 = vmatprep.mubr.f32.mxu0 0.0
    %1376 = vmatmul.mubr.f32.gmra.mxu0 %v1309
    %v1377 = vpop.f32.mrf.mxu0
    %v1378 = vadd.f32 0.0, %v1377
    %v1379 = vpop.f32.mrf.mxu0
    %1380 = vdwg.mxu0
    %v1381 = vadd.f32 %v1305, %v1378
    %v1382 = vxor.u32 %v1381, 2147483648
    %v1383 = vmul.f32 %v1382, 1.442695
    %v1384 = vpow.pop %v1383
    %v1385 = vadd.f32 %v1384, 1.0
    %v1386 = vrcp.pop %v1385
    %v1387 = vmul.f32 1.0, %v1386
    %v1388 = vtanh.pop %v1381
    %v1389 = vmul.f32 %v1387, %v1298
    %1391 = vrot.lane.b32.xlu0 %v1388, 32
    %v1392 = vpop.permute.xlu0 %1391
    %v1394 = vmul.f32 %v1387, %v1392
    %1396 = vrot.lane.b32.xlu0 %v1394, 32
    %v1397 = vpop.permute.xlu0 %1396
    %v1399 = vadd.f32 %v1389, %v1397
    %v1400 = vtanh.pop %v1399
    %1402 = vrot.lane.b32.xlu0 %v1400, 32
    %v1403 = vpop.permute.xlu0 %1402
    %v1405 = vmul.f32 %v1387, %v1403
    %v1406 = vld [vmem:[#allocation3 + $0x10] sm:$0xff]
    %1408 = vrot.lane.b32.xlu0 %v1405, 64
    %v1409 = vpop.permute.xlu0 %1408
    %v1410 = vsel %vm224, %v1409, 0
    %1412 = vmatprep.subr.mxu0 0.0
    %1413 = vmatpush1.msra.mxu0 0.0
    %1414 = vmatprep.subr.mxu0 0.0
    %1415 = vmatpush1.msra.mxu0 0.0
    %1416 = vmatprep.subr.mxu0 0.0
    %1417 = vmatpush1.msra.mxu0 0.0
    %1418 = vmatprep.subr.mxu0 0.0
    %1419 = vmatpush1.msra.mxu0 0.0
    %1420 = vmatprep.subr.mxu0 0.0
    %1421 = vmatpush1.msra.mxu0 0.0
    %1422 = vmatprep.subr.mxu0 0.0
    %1423 = vmatpush1.msra.mxu0 0.0
    %1424 = vmatprep.subr.mxu0 0.0
    %1425 = vmatpush1.msra.mxu0 0.0
    %1426 = vmatprep.subr.mxu0 0.0
    %1427 = vmatpush1.msra.mxu0 0.0
    %1428 = vmatprep.subr.mxu0 0.0
    %1429 = vmatpush1.msra.mxu0 0.0
    %1430 = vmatprep.subr.mxu0 0.0
    %1431 = vmatpush1.msra.mxu0 0.0
    %1432 = vmatprep.subr.mxu0 0.0
    %1433 = vmatpush1.msra.mxu0 0.0
    %1434 = vmatprep.subr.mxu0 0.0
    %1435 = vmatpush1.msra.mxu0 0.0
    %1436 = vmatprep.subr.mxu0 0.0
    %1437 = vmatpush1.msra.mxu0 %v1208
    %1438 = vmatprep.subr.mxu0 0.0
    %1439 = vmatpush1.msra.mxu0 %v1207
    %1440 = vmatprep.subr.mxu0 0.0
    %1441 = vmatpush1.msra.mxu0 %v1206
    %1442 = vmatprep.subr.mxu0 0.0
    %1443 = vmatpush1.msra.mxu0 %v1205
    %1444 = vmatprep.subr.mxu0 0.0
    %1445 = vmatpush2.msra.mxu0 0.0
    %1446 = vmatprep.subr.mxu0 0.0
    %1447 = vmatpush2.msra.mxu0 0.0
    %1448 = vmatprep.subr.mxu0 0.0
    %1449 = vmatpush2.msra.mxu0 0.0
    %1450 = vmatprep.subr.mxu0 0.0
    %1451 = vmatpush2.msra.mxu0 0.0
    %1452 = vmatprep.subr.mxu0 0.0
    %1453 = vmatpush2.msra.mxu0 0.0
    %1454 = vmatprep.subr.mxu0 0.0
    %1455 = vmatpush2.msra.mxu0 0.0
    %1456 = vmatprep.subr.mxu0 0.0
    %1457 = vmatpush2.msra.mxu0 0.0
    %1458 = vmatprep.subr.mxu0 0.0
    %1459 = vmatpush2.msra.mxu0 0.0
    %1460 = vmatprep.subr.mxu0 0.0
    %1461 = vmatpush2.msra.mxu0 0.0
    %1462 = vmatprep.subr.mxu0 0.0
    %1463 = vmatpush2.msra.mxu0 0.0
    %1464 = vmatprep.subr.mxu0 0.0
    %1465 = vmatpush2.msra.mxu0 0.0
    %1466 = vmatprep.subr.mxu0 0.0
    %1467 = vmatpush2.msra.mxu0 0.0
    %1468 = vmatprep.subr.mxu0 0.0
    %1469 = vmatpush2.msra.mxu0 0.0
    %1470 = vmatprep.subr.mxu0 0.0
    %1471 = vmatpush2.msra.mxu0 0.0
    %1472 = vmatprep.subr.mxu0 0.0
    %1473 = vmatpush2.msra.mxu0 0.0
    %1474 = vmatprep.subr.mxu0 0.0
    %1475 = vmatpush2.msra.mxu0 0.0
    %1476 = vmatprep.mubr.f32.mxu0 0.0
    %1477 = vmatmul.mubr.f32.gmra.mxu0 %v1410
    %v1478 = vpop.f32.mrf.mxu0
    %v1479 = vadd.f32 0.0, %v1478
    %v1480 = vpop.f32.mrf.mxu0
    %1481 = vdwg.mxu0
    %v1482 = vadd.f32 %v1406, %v1479
    %v1483 = vxor.u32 %v1482, 2147483648
    %v1484 = vmul.f32 %v1483, 1.442695
    %v1485 = vpow.pop %v1484
    %v1486 = vadd.f32 %v1485, 1.0
    %v1487 = vrcp.pop %v1486
    %v1488 = vmul.f32 1.0, %v1487
    %v1489 = vtanh.pop %v1482
    %v1490 = vmul.f32 %v1488, %v1399
    %1492 = vrot.lane.b32.xlu0 %v1489, 32
    %v1493 = vpop.permute.xlu0 %1492
    %v1495 = vmul.f32 %v1488, %v1493
    %1497 = vrot.lane.b32.xlu0 %v1495, 32
    %v1498 = vpop.permute.xlu0 %1497
    %v1500 = vadd.f32 %v1490, %v1498
    %v1501 = vtanh.pop %v1500
    %1503 = vrot.lane.b32.xlu0 %v1501, 32
    %v1504 = vpop.permute.xlu0 %1503
    %v1506 = vmul.f32 %v1488, %v1504
    %v1507 = vld [vmem:[#allocation3 + $0x18] sm:$0xff]
    %1509 = vrot.lane.b32.xlu0 %v1506, 64
    %v1510 = vpop.permute.xlu0 %1509
    %v1511 = vsel %vm224, %v1510, 0
    %1513 = vmatprep.subr.mxu0 0.0
    %1514 = vmatpush1.msra.mxu0 0.0
    %1515 = vmatprep.subr.mxu0 0.0
    %1516 = vmatpush1.msra.mxu0 0.0
    %1517 = vmatprep.subr.mxu0 0.0
    %1518 = vmatpush1.msra.mxu0 0.0
    %1519 = vmatprep.subr.mxu0 0.0
    %1520 = vmatpush1.msra.mxu0 0.0
    %1521 = vmatprep.subr.mxu0 0.0
    %1522 = vmatpush1.msra.mxu0 0.0
    %1523 = vmatprep.subr.mxu0 0.0
    %1524 = vmatpush1.msra.mxu0 0.0
    %1525 = vmatprep.subr.mxu0 0.0
    %1526 = vmatpush1.msra.mxu0 0.0
    %1527 = vmatprep.subr.mxu0 0.0
    %1528 = vmatpush1.msra.mxu0 0.0
    %1529 = vmatprep.subr.mxu0 0.0
    %1530 = vmatpush1.msra.mxu0 0.0
    %1531 = vmatprep.subr.mxu0 0.0
    %1532 = vmatpush1.msra.mxu0 0.0
    %1533 = vmatprep.subr.mxu0 0.0
    %1534 = vmatpush1.msra.mxu0 0.0
    %1535 = vmatprep.subr.mxu0 0.0
    %1536 = vmatpush1.msra.mxu0 0.0
    %1537 = vmatprep.subr.mxu0 0.0
    %1538 = vmatpush1.msra.mxu0 %v1208
    %1539 = vmatprep.subr.mxu0 0.0
    %1540 = vmatpush1.msra.mxu0 %v1207
    %1541 = vmatprep.subr.mxu0 0.0
    %1542 = vmatpush1.msra.mxu0 %v1206
    %1543 = vmatprep.subr.mxu0 0.0
    %1544 = vmatpush1.msra.mxu0 %v1205
    %1545 = vmatprep.subr.mxu0 0.0
    %1546 = vmatpush2.msra.mxu0 0.0
    %1547 = vmatprep.subr.mxu0 0.0
    %1548 = vmatpush2.msra.mxu0 0.0
    %1549 = vmatprep.subr.mxu0 0.0
    %1550 = vmatpush2.msra.mxu0 0.0
    %1551 = vmatprep.subr.mxu0 0.0
    %1552 = vmatpush2.msra.mxu0 0.0
    %1553 = vmatprep.subr.mxu0 0.0
    %1554 = vmatpush2.msra.mxu0 0.0
    %1555 = vmatprep.subr.mxu0 0.0
    %1556 = vmatpush2.msra.mxu0 0.0
    %1557 = vmatprep.subr.mxu0 0.0
    %1558 = vmatpush2.msra.mxu0 0.0
    %1559 = vmatprep.subr.mxu0 0.0
    %1560 = vmatpush2.msra.mxu0 0.0
    %1561 = vmatprep.subr.mxu0 0.0
    %1562 = vmatpush2.msra.mxu0 0.0
    %1563 = vmatprep.subr.mxu0 0.0
    %1564 = vmatpush2.msra.mxu0 0.0
    %1565 = vmatprep.subr.mxu0 0.0
    %1566 = vmatpush2.msra.mxu0 0.0
    %1567 = vmatprep.subr.mxu0 0.0
    %1568 = vmatpush2.msra.mxu0 0.0
    %1569 = vmatprep.subr.mxu0 0.0
    %1570 = vmatpush2.msra.mxu0 0.0
    %1571 = vmatprep.subr.mxu0 0.0
    %1572 = vmatpush2.msra.mxu0 0.0
    %1573 = vmatprep.subr.mxu0 0.0
    %1574 = vmatpush2.msra.mxu0 0.0
    %1575 = vmatprep.subr.mxu0 0.0
    %1576 = vmatpush2.msra.mxu0 0.0
    %1577 = vmatprep.mubr.f32.mxu0 0.0
    %1578 = vmatmul.mubr.f32.gmra.mxu0 %v1511
    %v1579 = vpop.f32.mrf.mxu0
    %v1580 = vadd.f32 0.0, %v1579
    %v1581 = vpop.f32.mrf.mxu0
    %1582 = vdwg.mxu0
    %v1583 = vadd.f32 %v1507, %v1580
    %v1584 = vxor.u32 %v1583, 2147483648
    %v1585 = vmul.f32 %v1584, 1.442695
    %v1586 = vpow.pop %v1585
    %v1587 = vadd.f32 %v1586, 1.0
    %v1588 = vrcp.pop %v1587
    %v1589 = vmul.f32 1.0, %v1588
    %v1590 = vtanh.pop %v1583
    %v1591 = vmul.f32 %v1589, %v1500
    %1593 = vrot.lane.b32.xlu0 %v1590, 32
    %v1594 = vpop.permute.xlu0 %1593
    %v1596 = vmul.f32 %v1589, %v1594
    %1598 = vrot.lane.b32.xlu0 %v1596, 32
    %v1599 = vpop.permute.xlu0 %1598
    %v1601 = vadd.f32 %v1591, %v1599
    %v1602 = vtanh.pop %v1601
    %1604 = vrot.lane.b32.xlu0 %v1602, 32
    %v1605 = vpop.permute.xlu0 %1604
    %v1607 = vmul.f32 %v1589, %v1605
    %v1608 = vld [vmem:[#allocation3 + $0x20] sm:$0xff]
    %1610 = vrot.lane.b32.xlu0 %v1607, 64
    %v1611 = vpop.permute.xlu0 %1610
    %v1612 = vsel %vm224, %v1611, 0
    %1614 = vmatprep.subr.mxu0 0.0
    %1615 = vmatpush1.msra.mxu0 0.0
    %1616 = vmatprep.subr.mxu0 0.0
    %1617 = vmatpush1.msra.mxu0 0.0
    %1618 = vmatprep.subr.mxu0 0.0
    %1619 = vmatpush1.msra.mxu0 0.0
    %1620 = vmatprep.subr.mxu0 0.0
    %1621 = vmatpush1.msra.mxu0 0.0
    %1622 = vmatprep.subr.mxu0 0.0
    %1623 = vmatpush1.msra.mxu0 0.0
    %1624 = vmatprep.subr.mxu0 0.0
    %1625 = vmatpush1.msra.mxu0 0.0
    %1626 = vmatprep.subr.mxu0 0.0
    %1627 = vmatpush1.msra.mxu0 0.0
    %1628 = vmatprep.subr.mxu0 0.0
    %1629 = vmatpush1.msra.mxu0 0.0
    %1630 = vmatprep.subr.mxu0 0.0
    %1631 = vmatpush1.msra.mxu0 0.0
    %1632 = vmatprep.subr.mxu0 0.0
    %1633 = vmatpush1.msra.mxu0 0.0
    %1634 = vmatprep.subr.mxu0 0.0
    %1635 = vmatpush1.msra.mxu0 0.0
    %1636 = vmatprep.subr.mxu0 0.0
    %1637 = vmatpush1.msra.mxu0 0.0
    %1638 = vmatprep.subr.mxu0 0.0
    %1639 = vmatpush1.msra.mxu0 %v1208
    %1640 = vmatprep.subr.mxu0 0.0
    %1641 = vmatpush1.msra.mxu0 %v1207
    %1642 = vmatprep.subr.mxu0 0.0
    %1643 = vmatpush1.msra.mxu0 %v1206
    %1644 = vmatprep.subr.mxu0 0.0
    %1645 = vmatpush1.msra.mxu0 %v1205
    %1646 = vmatprep.subr.mxu0 0.0
    %1647 = vmatpush2.msra.mxu0 0.0
    %1648 = vmatprep.subr.mxu0 0.0
    %1649 = vmatpush2.msra.mxu0 0.0
    %1650 = vmatprep.subr.mxu0 0.0
    %1651 = vmatpush2.msra.mxu0 0.0
    %1652 = vmatprep.subr.mxu0 0.0
    %1653 = vmatpush2.msra.mxu0 0.0
    %1654 = vmatprep.subr.mxu0 0.0
    %1655 = vmatpush2.msra.mxu0 0.0
    %1656 = vmatprep.subr.mxu0 0.0
    %1657 = vmatpush2.msra.mxu0 0.0
    %1658 = vmatprep.subr.mxu0 0.0
    %1659 = vmatpush2.msra.mxu0 0.0
    %1660 = vmatprep.subr.mxu0 0.0
    %1661 = vmatpush2.msra.mxu0 0.0
    %1662 = vmatprep.subr.mxu0 0.0
    %1663 = vmatpush2.msra.mxu0 0.0
    %1664 = vmatprep.subr.mxu0 0.0
    %1665 = vmatpush2.msra.mxu0 0.0
    %1666 = vmatprep.subr.mxu0 0.0
    %1667 = vmatpush2.msra.mxu0 0.0
    %1668 = vmatprep.subr.mxu0 0.0
    %1669 = vmatpush2.msra.mxu0 0.0
    %1670 = vmatprep.subr.mxu0 0.0
    %1671 = vmatpush2.msra.mxu0 0.0
    %1672 = vmatprep.subr.mxu0 0.0
    %1673 = vmatpush2.msra.mxu0 0.0
    %1674 = vmatprep.subr.mxu0 0.0
    %1675 = vmatpush2.msra.mxu0 0.0
    %1676 = vmatprep.subr.mxu0 0.0
    %1677 = vmatpush2.msra.mxu0 0.0
    %1678 = vmatprep.mubr.f32.mxu0 0.0
    %1679 = vmatmul.mubr.f32.gmra.mxu0 %v1612
    %v1680 = vpop.f32.mrf.mxu0
    %v1681 = vadd.f32 0.0, %v1680
    %v1682 = vpop.f32.mrf.mxu0
    %1683 = vdwg.mxu0
    %v1684 = vadd.f32 %v1608, %v1681
    %v1685 = vxor.u32 %v1684, 2147483648
    %v1686 = vmul.f32 %v1685, 1.442695
    %v1687 = vpow.pop %v1686
    %v1688 = vadd.f32 %v1687, 1.0
    %v1689 = vrcp.pop %v1688
    %v1690 = vmul.f32 1.0, %v1689
    %v1691 = vtanh.pop %v1684
    %v1692 = vmul.f32 %v1690, %v1601
    %1694 = vrot.lane.b32.xlu0 %v1691, 32
    %v1695 = vpop.permute.xlu0 %1694
    %v1697 = vmul.f32 %v1690, %v1695
    %1699 = vrot.lane.b32.xlu0 %v1697, 32
    %v1700 = vpop.permute.xlu0 %1699
    %v1702 = vadd.f32 %v1692, %v1700
    %v1703 = vtanh.pop %v1702
    %1705 = vrot.lane.b32.xlu0 %v1703, 32
    %v1706 = vpop.permute.xlu0 %1705
    %v1708 = vmul.f32 %v1690, %v1706
    %v1709 = vld [vmem:[#allocation3 + $0x28] sm:$0xff]
    %1711 = vrot.lane.b32.xlu0 %v1708, 64
    %v1712 = vpop.permute.xlu0 %1711
    %v1713 = vsel %vm224, %v1712, 0
    %1715 = vmatprep.subr.mxu0 0.0
    %1716 = vmatpush1.msra.mxu0 0.0
    %1717 = vmatprep.subr.mxu0 0.0
    %1718 = vmatpush1.msra.mxu0 0.0
    %1719 = vmatprep.subr.mxu0 0.0
    %1720 = vmatpush1.msra.mxu0 0.0
    %1721 = vmatprep.subr.mxu0 0.0
    %1722 = vmatpush1.msra.mxu0 0.0
    %1723 = vmatprep.subr.mxu0 0.0
    %1724 = vmatpush1.msra.mxu0 0.0
    %1725 = vmatprep.subr.mxu0 0.0
    %1726 = vmatpush1.msra.mxu0 0.0
    %1727 = vmatprep.subr.mxu0 0.0
    %1728 = vmatpush1.msra.mxu0 0.0
    %1729 = vmatprep.subr.mxu0 0.0
    %1730 = vmatpush1.msra.mxu0 0.0
    %1731 = vmatprep.subr.mxu0 0.0
    %1732 = vmatpush1.msra.mxu0 0.0
    %1733 = vmatprep.subr.mxu0 0.0
    %1734 = vmatpush1.msra.mxu0 0.0
    %1735 = vmatprep.subr.mxu0 0.0
    %1736 = vmatpush1.msra.mxu0 0.0
    %1737 = vmatprep.subr.mxu0 0.0
    %1738 = vmatpush1.msra.mxu0 0.0
    %1739 = vmatprep.subr.mxu0 0.0
    %1740 = vmatpush1.msra.mxu0 %v1208
    %1741 = vmatprep.subr.mxu0 0.0
    %1742 = vmatpush1.msra.mxu0 %v1207
    %1743 = vmatprep.subr.mxu0 0.0
    %1744 = vmatpush1.msra.mxu0 %v1206
    %1745 = vmatprep.subr.mxu0 0.0
    %1746 = vmatpush1.msra.mxu0 %v1205
    %1747 = vmatprep.subr.mxu0 0.0
    %1748 = vmatpush2.msra.mxu0 0.0
    %1749 = vmatprep.subr.mxu0 0.0
    %1750 = vmatpush2.msra.mxu0 0.0
    %1751 = vmatprep.subr.mxu0 0.0
    %1752 = vmatpush2.msra.mxu0 0.0
    %1753 = vmatprep.subr.mxu0 0.0
    %1754 = vmatpush2.msra.mxu0 0.0
    %1755 = vmatprep.subr.mxu0 0.0
    %1756 = vmatpush2.msra.mxu0 0.0
    %1757 = vmatprep.subr.mxu0 0.0
    %1758 = vmatpush2.msra.mxu0 0.0
    %1759 = vmatprep.subr.mxu0 0.0
    %1760 = vmatpush2.msra.mxu0 0.0
    %1761 = vmatprep.subr.mxu0 0.0
    %1762 = vmatpush2.msra.mxu0 0.0
    %1763 = vmatprep.subr.mxu0 0.0
    %1764 = vmatpush2.msra.mxu0 0.0
    %1765 = vmatprep.subr.mxu0 0.0
    %1766 = vmatpush2.msra.mxu0 0.0
    %1767 = vmatprep.subr.mxu0 0.0
    %1768 = vmatpush2.msra.mxu0 0.0
    %1769 = vmatprep.subr.mxu0 0.0
    %1770 = vmatpush2.msra.mxu0 0.0
    %1771 = vmatprep.subr.mxu0 0.0
    %1772 = vmatpush2.msra.mxu0 0.0
    %1773 = vmatprep.subr.mxu0 0.0
    %1774 = vmatpush2.msra.mxu0 0.0
    %1775 = vmatprep.subr.mxu0 0.0
    %1776 = vmatpush2.msra.mxu0 0.0
    %1777 = vmatprep.subr.mxu0 0.0
    %1778 = vmatpush2.msra.mxu0 0.0
    %1779 = vmatprep.mubr.f32.mxu0 0.0
    %1780 = vmatmul.mubr.f32.gmra.mxu0 %v1713
    %v1781 = vpop.f32.mrf.mxu0
    %v1782 = vadd.f32 0.0, %v1781
    %v1783 = vpop.f32.mrf.mxu0
    %1784 = vdwg.mxu0
    %v1785 = vadd.f32 %v1709, %v1782
    %v1786 = vxor.u32 %v1785, 2147483648
    %v1787 = vmul.f32 %v1786, 1.442695
    %v1788 = vpow.pop %v1787
    %v1789 = vadd.f32 %v1788, 1.0
    %v1790 = vrcp.pop %v1789
    %v1791 = vmul.f32 1.0, %v1790
    %v1792 = vtanh.pop %v1785
    %v1793 = vmul.f32 %v1791, %v1702
    %1795 = vrot.lane.b32.xlu0 %v1792, 32
    %v1796 = vpop.permute.xlu0 %1795
    %v1798 = vmul.f32 %v1791, %v1796
    %1800 = vrot.lane.b32.xlu0 %v1798, 32
    %v1801 = vpop.permute.xlu0 %1800
    %v1803 = vadd.f32 %v1793, %v1801
    %v1804 = vtanh.pop %v1803
    %1806 = vrot.lane.b32.xlu0 %v1804, 32
    %v1807 = vpop.permute.xlu0 %1806
    %v1809 = vmul.f32 %v1791, %v1807
    %v1810 = vld [vmem:[#allocation3 + $0x30] sm:$0xff]
    %1812 = vrot.lane.b32.xlu0 %v1809, 64
    %v1813 = vpop.permute.xlu0 %1812
    %v1814 = vsel %vm224, %v1813, 0
    %1816 = vmatprep.subr.mxu0 0.0
    %1817 = vmatpush1.msra.mxu0 0.0
    %1818 = vmatprep.subr.mxu0 0.0
    %1819 = vmatpush1.msra.mxu0 0.0
    %1820 = vmatprep.subr.mxu0 0.0
    %1821 = vmatpush1.msra.mxu0 0.0
    %1822 = vmatprep.subr.mxu0 0.0
    %1823 = vmatpush1.msra.mxu0 0.0
    %1824 = vmatprep.subr.mxu0 0.0
    %1825 = vmatpush1.msra.mxu0 0.0
    %1826 = vmatprep.subr.mxu0 0.0
    %1827 = vmatpush1.msra.mxu0 0.0
    %1828 = vmatprep.subr.mxu0 0.0
    %1829 = vmatpush1.msra.mxu0 0.0
    %1830 = vmatprep.subr.mxu0 0.0
    %1831 = vmatpush1.msra.mxu0 0.0
    %1832 = vmatprep.subr.mxu0 0.0
    %1833 = vmatpush1.msra.mxu0 0.0
    %1834 = vmatprep.subr.mxu0 0.0
    %1835 = vmatpush1.msra.mxu0 0.0
    %1836 = vmatprep.subr.mxu0 0.0
    %1837 = vmatpush1.msra.mxu0 0.0
    %1838 = vmatprep.subr.mxu0 0.0
    %1839 = vmatpush1.msra.mxu0 0.0
    %1840 = vmatprep.subr.mxu0 0.0
    %1841 = vmatpush1.msra.mxu0 %v1208
    %1842 = vmatprep.subr.mxu0 0.0
    %1843 = vmatpush1.msra.mxu0 %v1207
    %1844 = vmatprep.subr.mxu0 0.0
    %1845 = vmatpush1.msra.mxu0 %v1206
    %1846 = vmatprep.subr.mxu0 0.0
    %1847 = vmatpush1.msra.mxu0 %v1205
    %1848 = vmatprep.subr.mxu0 0.0
    %1849 = vmatpush2.msra.mxu0 0.0
    %1850 = vmatprep.subr.mxu0 0.0
    %1851 = vmatpush2.msra.mxu0 0.0
    %1852 = vmatprep.subr.mxu0 0.0
    %1853 = vmatpush2.msra.mxu0 0.0
    %1854 = vmatprep.subr.mxu0 0.0
    %1855 = vmatpush2.msra.mxu0 0.0
    %1856 = vmatprep.subr.mxu0 0.0
    %1857 = vmatpush2.msra.mxu0 0.0
    %1858 = vmatprep.subr.mxu0 0.0
    %1859 = vmatpush2.msra.mxu0 0.0
    %1860 = vmatprep.subr.mxu0 0.0
    %1861 = vmatpush2.msra.mxu0 0.0
    %1862 = vmatprep.subr.mxu0 0.0
    %1863 = vmatpush2.msra.mxu0 0.0
    %1864 = vmatprep.subr.mxu0 0.0
    %1865 = vmatpush2.msra.mxu0 0.0
    %1866 = vmatprep.subr.mxu0 0.0
    %1867 = vmatpush2.msra.mxu0 0.0
    %1868 = vmatprep.subr.mxu0 0.0
    %1869 = vmatpush2.msra.mxu0 0.0
    %1870 = vmatprep.subr.mxu0 0.0
    %1871 = vmatpush2.msra.mxu0 0.0
    %1872 = vmatprep.subr.mxu0 0.0
    %1873 = vmatpush2.msra.mxu0 0.0
    %1874 = vmatprep.subr.mxu0 0.0
    %1875 = vmatpush2.msra.mxu0 0.0
    %1876 = vmatprep.subr.mxu0 0.0
    %1877 = vmatpush2.msra.mxu0 0.0
    %1878 = vmatprep.subr.mxu0 0.0
    %1879 = vmatpush2.msra.mxu0 0.0
    %1880 = vmatprep.mubr.f32.mxu0 0.0
    %1881 = vmatmul.mubr.f32.gmra.mxu0 %v1814
    %v1882 = vpop.f32.mrf.mxu0
    %v1883 = vadd.f32 0.0, %v1882
    %v1884 = vpop.f32.mrf.mxu0
    %1885 = vdwg.mxu0
    %v1886 = vadd.f32 %v1810, %v1883
    %v1887 = vxor.u32 %v1886, 2147483648
    %v1888 = vmul.f32 %v1887, 1.442695
    %v1889 = vpow.pop %v1888
    %v1890 = vadd.f32 %v1889, 1.0
    %v1891 = vrcp.pop %v1890
    %v1892 = vmul.f32 1.0, %v1891
    %v1893 = vtanh.pop %v1886
    %v1894 = vmul.f32 %v1892, %v1803
    %1896 = vrot.lane.b32.xlu0 %v1893, 32
    %v1897 = vpop.permute.xlu0 %1896
    %v1899 = vmul.f32 %v1892, %v1897
    %1901 = vrot.lane.b32.xlu0 %v1899, 32
    %v1902 = vpop.permute.xlu0 %1901
    %v1904 = vadd.f32 %v1894, %v1902
    %v1905 = vtanh.pop %v1904
    %1907 = vrot.lane.b32.xlu0 %v1905, 32
    %v1908 = vpop.permute.xlu0 %1907
    %v1910 = vmul.f32 %v1892, %v1908
    %v1911 = vld [vmem:[#allocation3 + $0x38] sm:$0xff]
    %1913 = vrot.lane.b32.xlu0 %v1910, 64
    %v1914 = vpop.permute.xlu0 %1913
    %v1915 = vsel %vm224, %v1914, 0
    %1917 = vmatprep.subr.mxu0 0.0
    %1918 = vmatpush1.msra.mxu0 0.0
    %1919 = vmatprep.subr.mxu0 0.0
    %1920 = vmatpush1.msra.mxu0 0.0
    %1921 = vmatprep.subr.mxu0 0.0
    %1922 = vmatpush1.msra.mxu0 0.0
    %1923 = vmatprep.subr.mxu0 0.0
    %1924 = vmatpush1.msra.mxu0 0.0
    %1925 = vmatprep.subr.mxu0 0.0
    %1926 = vmatpush1.msra.mxu0 0.0
    %1927 = vmatprep.subr.mxu0 0.0
    %1928 = vmatpush1.msra.mxu0 0.0
    %1929 = vmatprep.subr.mxu0 0.0
    %1930 = vmatpush1.msra.mxu0 0.0
    %1931 = vmatprep.subr.mxu0 0.0
    %1932 = vmatpush1.msra.mxu0 0.0
    %1933 = vmatprep.subr.mxu0 0.0
    %1934 = vmatpush1.msra.mxu0 0.0
    %1935 = vmatprep.subr.mxu0 0.0
    %1936 = vmatpush1.msra.mxu0 0.0
    %1937 = vmatprep.subr.mxu0 0.0
    %1938 = vmatpush1.msra.mxu0 0.0
    %1939 = vmatprep.subr.mxu0 0.0
    %1940 = vmatpush1.msra.mxu0 0.0
    %1941 = vmatprep.subr.mxu0 0.0
    %1942 = vmatpush1.msra.mxu0 %v1208
    %1943 = vmatprep.subr.mxu0 0.0
    %1944 = vmatpush1.msra.mxu0 %v1207
    %1945 = vmatprep.subr.mxu0 0.0
    %1946 = vmatpush1.msra.mxu0 %v1206
    %1947 = vmatprep.subr.mxu0 0.0
    %1948 = vmatpush1.msra.mxu0 %v1205
    %1949 = vmatprep.subr.mxu0 0.0
    %1950 = vmatpush2.msra.mxu0 0.0
    %1951 = vmatprep.subr.mxu0 0.0
    %1952 = vmatpush2.msra.mxu0 0.0
    %1953 = vmatprep.subr.mxu0 0.0
    %1954 = vmatpush2.msra.mxu0 0.0
    %1955 = vmatprep.subr.mxu0 0.0
    %1956 = vmatpush2.msra.mxu0 0.0
    %1957 = vmatprep.subr.mxu0 0.0
    %1958 = vmatpush2.msra.mxu0 0.0
    %1959 = vmatprep.subr.mxu0 0.0
    %1960 = vmatpush2.msra.mxu0 0.0
    %1961 = vmatprep.subr.mxu0 0.0
    %1962 = vmatpush2.msra.mxu0 0.0
    %1963 = vmatprep.subr.mxu0 0.0
    %1964 = vmatpush2.msra.mxu0 0.0
    %1965 = vmatprep.subr.mxu0 0.0
    %1966 = vmatpush2.msra.mxu0 0.0
    %1967 = vmatprep.subr.mxu0 0.0
    %1968 = vmatpush2.msra.mxu0 0.0
    %1969 = vmatprep.subr.mxu0 0.0
    %1970 = vmatpush2.msra.mxu0 0.0
    %1971 = vmatprep.subr.mxu0 0.0
    %1972 = vmatpush2.msra.mxu0 0.0
    %1973 = vmatprep.subr.mxu0 0.0
    %1974 = vmatpush2.msra.mxu0 0.0
    %1975 = vmatprep.subr.mxu0 0.0
    %1976 = vmatpush2.msra.mxu0 0.0
    %1977 = vmatprep.subr.mxu0 0.0
    %1978 = vmatpush2.msra.mxu0 0.0
    %1979 = vmatprep.subr.mxu0 0.0
    %1980 = vmatpush2.msra.mxu0 0.0
    %1981 = vmatprep.mubr.f32.mxu0 0.0
    %1982 = vmatmul.mubr.f32.gmra.mxu0 %v1915
    %v1983 = vpop.f32.mrf.mxu0
    %v1984 = vadd.f32 0.0, %v1983
    %v1985 = vpop.f32.mrf.mxu0
    %1986 = vdwg.mxu0
    %v1987 = vadd.f32 %v1911, %v1984
    %v1988 = vxor.u32 %v1987, 2147483648
    %v1989 = vmul.f32 %v1988, 1.442695
    %v1990 = vpow.pop %v1989
    %v1991 = vadd.f32 %v1990, 1.0
    %v1992 = vrcp.pop %v1991
    %v1993 = vmul.f32 1.0, %v1992
    %v1994 = vtanh.pop %v1987
    %v1995 = vmul.f32 %v1993, %v1904
    %1997 = vrot.lane.b32.xlu0 %v1994, 32
    %v1998 = vpop.permute.xlu0 %1997
    %v2000 = vmul.f32 %v1993, %v1998
    %2002 = vrot.lane.b32.xlu0 %v2000, 32
    %v2003 = vpop.permute.xlu0 %2002
    %v2005 = vadd.f32 %v1995, %v2003
    %v2006 = vtanh.pop %v2005
    %2008 = vrot.lane.b32.xlu0 %v2006, 32
    %v2009 = vpop.permute.xlu0 %2008
    %v2011 = vmul.f32 %v1993, %v2009
    %v2012 = vld [vmem:[#allocation7] sm:$0xff]
    %v2013 = vld [vmem:[#allocation7 + $0x8] sm:$0xff]
    %v2014 = vld [vmem:[#allocation7 + $0x10] sm:$0xff]
    %v2015 = vld [vmem:[#allocation7 + $0x18] sm:$0xff]
    %v2016 = vld [vmem:[%s8] sm:$0x1]
    %v2018 = vlaneseq
    %v2019 = vshrl.u32 %v2018, 7
    %v2020 = vsub.s32 0, %v2019
    %v2021 = vrot.slane %v2016, %v2020
    %2024 = vrot.lane.b32.xlu0 %v2011, 64
    %v2025 = vpop.permute.xlu0 %2024
    %v2026 = vsel %vm224, %v2025, 0
    %2028 = vmatprep.subr.mxu0 0.0
    %2029 = vmatpush1.msra.mxu0 0.0
    %2030 = vmatprep.subr.mxu0 0.0
    %2031 = vmatpush1.msra.mxu0 0.0
    %2032 = vmatprep.subr.mxu0 0.0
    %2033 = vmatpush1.msra.mxu0 0.0
    %2034 = vmatprep.subr.mxu0 0.0
    %2035 = vmatpush1.msra.mxu0 0.0
    %2036 = vmatprep.subr.mxu0 0.0
    %2037 = vmatpush1.msra.mxu0 0.0
    %2038 = vmatprep.subr.mxu0 0.0
    %2039 = vmatpush1.msra.mxu0 0.0
    %2040 = vmatprep.subr.mxu0 0.0
    %2041 = vmatpush1.msra.mxu0 0.0
    %2042 = vmatprep.subr.mxu0 0.0
    %2043 = vmatpush1.msra.mxu0 0.0
    %2044 = vmatprep.subr.mxu0 0.0
    %2045 = vmatpush1.msra.mxu0 0.0
    %2046 = vmatprep.subr.mxu0 0.0
    %2047 = vmatpush1.msra.mxu0 0.0
    %2048 = vmatprep.subr.mxu0 0.0
    %2049 = vmatpush1.msra.mxu0 0.0
    %2050 = vmatprep.subr.mxu0 0.0
    %2051 = vmatpush1.msra.mxu0 0.0
    %2052 = vmatprep.subr.mxu0 0.0
    %2053 = vmatpush1.msra.mxu0 %v2015
    %2054 = vmatprep.subr.mxu0 0.0
    %2055 = vmatpush1.msra.mxu0 %v2014
    %2056 = vmatprep.subr.mxu0 0.0
    %2057 = vmatpush1.msra.mxu0 %v2013
    %2058 = vmatprep.subr.mxu0 0.0
    %2059 = vmatpush1.msra.mxu0 %v2012
    %2060 = vmatprep.subr.mxu0 0.0
    %2061 = vmatpush2.msra.mxu0 0.0
    %2062 = vmatprep.subr.mxu0 0.0
    %2063 = vmatpush2.msra.mxu0 0.0
    %2064 = vmatprep.subr.mxu0 0.0
    %2065 = vmatpush2.msra.mxu0 0.0
    %2066 = vmatprep.subr.mxu0 0.0
    %2067 = vmatpush2.msra.mxu0 0.0
    %2068 = vmatprep.subr.mxu0 0.0
    %2069 = vmatpush2.msra.mxu0 0.0
    %2070 = vmatprep.subr.mxu0 0.0
    %2071 = vmatpush2.msra.mxu0 0.0
    %2072 = vmatprep.subr.mxu0 0.0
    %2073 = vmatpush2.msra.mxu0 0.0
    %2074 = vmatprep.subr.mxu0 0.0
    %2075 = vmatpush2.msra.mxu0 0.0
    %2076 = vmatprep.subr.mxu0 0.0
    %2077 = vmatpush2.msra.mxu0 0.0
    %2078 = vmatprep.subr.mxu0 0.0
    %2079 = vmatpush2.msra.mxu0 0.0
    %2080 = vmatprep.subr.mxu0 0.0
    %2081 = vmatpush2.msra.mxu0 0.0
    %2082 = vmatprep.subr.mxu0 0.0
    %2083 = vmatpush2.msra.mxu0 0.0
    %2084 = vmatprep.subr.mxu0 0.0
    %2085 = vmatpush2.msra.mxu0 0.0
    %2086 = vmatprep.subr.mxu0 0.0
    %2087 = vmatpush2.msra.mxu0 0.0
    %2088 = vmatprep.subr.mxu0 0.0
    %2089 = vmatpush2.msra.mxu0 0.0
    %2090 = vmatprep.subr.mxu0 0.0
    %2091 = vmatpush2.msra.mxu0 0.0
    %2092 = vmatprep.mubr.f32.mxu0 0.0
    %2093 = vmatmul.mubr.f32.gmra.mxu0 %v2026
    %v2094 = vpop.f32.mrf.mxu0
    %v2095 = vadd.f32 %v2021, %v2094
    %v2096 = vpop.f32.mrf.mxu0
    %2097 = vdwg.mxu0
    %2098 = vst [vmem:[#allocation9] sm:$0xff] %v2095
    // Predicated region
    $region46: #{tpu_custom_call.1} parent=1 // pred_check
      _
    $region47: #{tpu_custom_call.1} parent=1 // pred_check_branch
      %2100 = sbr.rel (0) target = $region49
    $region48: #{tpu_custom_call.1} parent=1 // pred_region
      %s2102 = ssub.s32 128, 128
      %2103 = vsyncadd [#allocation6], %s2102
      %s2105 = sshll.u32 [#allocation9], 4
      %s2106 = int_to_ptr.vmem [resolvable:$true] %s2105
      %2108 = dma.vmem_to_hbm [thread:$0]  %s2106, 128, %s9, [#allocation6]
    $region49: #{tpu_custom_call.1} parent=1 // pred_fallthru
      _
    // Predicated region
    $region50: #{tpu_custom_call.1} parent=1 // pred_check
      _
    $region51: #{tpu_custom_call.1} parent=1 // pred_check_branch
      %2110 = sbr.rel (0) target = $region53
    $region52: #{tpu_custom_call.1} parent=1 // pred_region
      %2111 = dma.done [#allocation6], 128
    $region53: #{tpu_custom_call.1} parent=1 // pred_fallthru
      _
    %2112 = vsyncpa [#allocation5], 1
    %2113 = vsyncpa [#allocation8], 1
    %2114 = vsyncpa [#allocation6], 1

</llo_original>
